<compile_context>
chip_gen: v5e
topology: v5e:2x2
jax: 0.10.0
libtpu: 0.0.40
codegen_flags: <defaults>
</compile_context>

<pallas_src>
from math import sqrt

import numpy as np
import jax
import jax.numpy as jnp
from jax.experimental import pallas as pl
from jax.experimental.pallas import tpu as pltpu


# ---------------- irreps bookkeeping (mirrors o3.Irreps, l <= 1) -------------
# each irrep: (multiplicity, l, parity)
IRREPS_IN1 = [(8, 0, +1), (8, 1, -1)]       # "8x0e + 8x1o" -> dim 32
IRREPS_IN2 = [(1, 0, +1), (1, 1, -1)]       # "1x0e + 1x1o" -> dim 4
IRREPS_IN2_NONE = [(1, 0, +1)]              # irreps_in2=None path -> "1x0e", dim 1
IRREPS_OUT = [(8, 0, +1), (8, 1, -1)]       # "8x0e + 8x1o" -> dim 32


def irreps_dim(irreps):
    return sum(m * (2 * l + 1) for m, l, _ in irreps)


def irreps_slices(irreps):
    s, out = 0, []
    for m, l, _ in irreps:
        d = m * (2 * l + 1)
        out.append((s, s + d))
        s += d
    return out


def wigner_3j(l1, l2, l3):
    # Real-basis Wigner 3j (Frobenius norm 1), hardcoded for l <= 1.
    # TODO(synk): sign convention may differ from e3nn's change-of-basis build;
    # sparsity structure and magnitudes are identical.
    key = (l1, l2, l3)
    if key == (0, 0, 0):
        return np.ones((1, 1, 1), np.float64)
    if key == (1, 1, 0):
        return (np.eye(3) / np.sqrt(3.0)).reshape(3, 3, 1)
    if key == (0, 1, 1):
        return (np.eye(3) / np.sqrt(3.0)).reshape(1, 3, 3)
    if key == (1, 0, 1):
        return (np.eye(3) / np.sqrt(3.0)).reshape(3, 1, 3)
    if key == (1, 1, 1):
        eps = np.zeros((3, 3, 3))
        for i, j, k in [(0, 1, 2), (1, 2, 0), (2, 0, 1)]:
            eps[i, j, k] = 1.0
            eps[j, i, k] = -1.0
        return eps / np.sqrt(6.0)
    raise NotImplementedError(key)


def build_instructions(irr1, irr2, irr_out):
    # FullyConnectedTensorProduct: every compatible (i1, i2, i_out), mode 'uvw'.
    instrs = []
    for i1, (_, l1, p1) in enumerate(irr1):
        for i2, (_, l2, p2) in enumerate(irr2):
            for io, (_, lo, po) in enumerate(irr_out):
                if po == p1 * p2 and abs(l1 - l2) <= lo <= l1 + l2:
                    instrs.append((i1, i2, io))
    return instrs


def build_o3_tensor_product_params(key, irr1, irr2, irr_out, tp_rescale=True):
    """Builds the dense bilinear tensor W3[D1,D2,DO], the sqrt_k correction and
    the (vectorised) bias, reproducing O3TensorProduct.__init__ /
    tensor_product_init / vectorise with deterministic random weights."""
    instrs = build_instructions(irr1, irr2, irr_out)
    sl1 = irreps_slices(irr1)
    sl2 = irreps_slices(irr2)
    slo = irreps_slices(irr_out)
    D1, D2, DO = irreps_dim(irr1), irreps_dim(irr2), irreps_dim(irr_out)

    # slices_fan_in: sum of mul1*mul2 over instructions feeding each output slice
    fan = {}
    for (i1, i2, io) in instrs:
        fan[io] = fan.get(io, 0) + irr1[i1][0] * irr2[i2][0]

    W3 = np.zeros((D1, D2, DO), np.float64)
    sqrt_k_correction = np.zeros((DO,), np.float64)

    keys = jax.random.split(key, len(instrs) + len(irr_out))
    for idx, (i1, i2, io) in enumerate(instrs):
        m1, l1, _ = irr1[i1]
        m2, l2, _ = irr2[i2]
        mo, lo, _ = irr_out[io]
        # e3nn path weight: 'component' irrep norm, 'element' path norm, 'uvw' mode
        path_weight = sqrt((2 * lo + 1) / fan[io])
        sqrt_k = (1.0 / sqrt(fan[io])) if tp_rescale else 1.0
        w = np.asarray(
            jax.random.uniform(keys[idx], (m1, m2, mo), jnp.float32,
                               minval=-sqrt_k, maxval=sqrt_k),
            np.float64,
        )
        cg = wigner_3j(l1, l2, lo)
        block = np.einsum("uvw,ijk->uivjwk", w, cg).reshape(
            m1 * (2 * l1 + 1), m2 * (2 * l2 + 1), mo * (2 * lo + 1)
        )
        W3[sl1[i1][0]:sl1[i1][1], sl2[i2][0]:sl2[i2][1], slo[io][0]:slo[io][1]] += (
            path_weight * block
        )
        sqrt_k_correction[slo[io][0]:slo[io][1]] = sqrt_k

    # biases on l == 0 output slices (vectorised into a full-width vector that
    # is zero outside bias_idx, which is equivalent to the indexed add)
    bias_full = np.zeros((DO,), np.float64)
    for io, (mo, lo, _) in enumerate(irr_out):
        if lo == 0 and io in fan:
            sqrt_k = 1.0 / sqrt(fan[io])
            b = np.asarray(
                jax.random.uniform(keys[len(instrs) + io], (mo,), jnp.float32,
                                   minval=-sqrt_k, maxval=sqrt_k),
                np.float64,
            )
            bias_full[slo[io][0]:slo[io][1]] = b

    return (
        jnp.asarray(W3, jnp.float32),
        jnp.asarray(sqrt_k_correction, jnp.float32),
        jnp.asarray(bias_full, jnp.float32),
    )


def fold_tp_rescale(W3, sqrt_k_correction, tp_rescale=True):
    """einsum(x1,x2,W3)/sqrt_k + b  ==  einsum(x1,x2, W3 * 1/sqrt_k) + b.
    where-guard avoids a divide-by-zero for output slices with no tp path."""
    if not tp_rescale:
        return W3
    inv_k = jnp.where(sqrt_k_correction > 0, 1.0 / sqrt_k_correction, 1.0)
    return W3 * inv_k[None, None, :]


# ------------------------------- Pallas kernels -------------------------------
def _o3_tp_bilinear_kernel(x1_ref, x2_ref, s_ref, w_ref, bias_ref, o_ref):
    # Re-laned tiles (G = 128 // D1 original rows per re-laned row):
    #   x1:   (tn, G*D1)         g-major, lane-dense (128 lanes here)
    #   x2:   (tn, G*D2)         g-major (16 lanes here; tiny)
    #   s:    (G*D2, D2*G*D1)    constant 0/1 spread: s[g*D2+j, j*G*D1+g*D1+i]=1
    #   w:    (D2*G*D1, G*DO)    block weight: w[j*G*D1+g*D1+i, g*DO+k]=W3_eff[i,j,k]
    #   bias: (1, G*DO)          scalar-slice bias tiled G times
    #   o:    (tn, G*DO)         lane-dense output (128 lanes here)
    x1 = x1_ref[...]
    n_rep = w_ref.shape[0] // x1.shape[1]          # = D2 (static)
    # x1 replicated D2 times along lanes: every piece is 128-lane aligned, so
    # this lowers to plain vreg copies (no XLU lane rotation).
    a = jnp.concatenate([x1] * n_rep, axis=-1)                        # (tn, D2*G*D1)
    # x2 spread onto the same 512-lane layout via a tiny MXU matmul (K = G*D2),
    # keeping the per-column lane broadcasts off the VPU/XLU.
    b = jnp.dot(x2_ref[...], s_ref[...], preferred_element_type=jnp.float32)
    # x12[r, j*G*D1 + g*D1 + i] = x1[G*r+g, i] * x2[G*r+g, j]
    x12 = a * b
    acc = jnp.dot(x12, w_ref[...], preferred_element_type=jnp.float32)
    # tp_rescale is pre-folded into w; only the scalar-slice bias remains.
    o_ref[...] = (acc + bias_ref[...]).astype(o_ref.dtype)


def _o3_tp_matmul_kernel(x1_ref, w_ref, bias_ref, o_ref):
    # data_in2=None path (irreps_in2='1x0e', x2 == 1): one dense lane-dense
    # matmul against the (G*D1, G*DO) block-diagonal weight, plus bias.
    acc = jnp.dot(x1_ref[...], w_ref[...], preferred_element_type=jnp.float32)
    o_ref[...] = (acc + bias_ref[...]).astype(o_ref.dtype)


# ------------------------------- host wrapper ---------------------------------
def _round_up(x, m):
    return ((x + m - 1) // m) * m


def _pick_tiling(n_rows, target):
    """Row tiling over the re-laned array.  Small problems run as one full
    block (launch-overhead regime).  Large problems use >= 8 grid steps so
    both v7x TensorCores get >= 4 pipelined steps each; the ragged trailing
    block (if any) is clipped by the Pallas pipeline, so no wrapper padding."""
    if n_rows <= target:
        return n_rows, 1
    tn = min(target, _round_up(pl.cdiv(n_rows, 8), 8))
    return tn, pl.cdiv(n_rows, tn)


def o3_tensor_product(data_in1, data_in2, W3_eff, bias_full, *, tn4_target=1024):
    """Forward of O3TensorProduct:
         out = einsum('ni,nj,ijk->nk', x1, x2, W3_eff) + bias
       with W3_eff = W3 * (1/sqrt_k_correction) (tp_rescale pre-folded).

       Rows are processed in groups of G = 128 // D1 so x1 loads and output
       stores are 128-lane dense; the weight becomes a small block-diagonal
       matrix (one copy per row group)."""
    N, D1 = data_in1.shape
    assert W3_eff.shape[0] == D1
    D2, DO = W3_eff.shape[1], W3_eff.shape[2]
    assert 128 % D1 == 0, "re-laned path assumes D1 divides 128"
    G = 128 // D1
    if data_in2 is not None:
        assert data_in2.shape == (N, D2)

    # Group-of-G raggedness: pad only the (<= G-1)-row tail, never whole tiles.
    rem = (-N) % G
    x1, x2 = data_in1, data_in2
    if rem:
        # TODO(synk): this tiny tail pad still costs a full XLA copy of x1/x2;
        # a separate tail call would avoid it, not worth it for <= 3 rows.
        x1 = jnp.pad(x1, ((0, rem), (0, 0)))
        if x2 is not None:
            x2 = jnp.pad(x2, ((0, rem), (0, 0)))
    Np = N + rem
    N_r = Np // G

    x1_r = x1.reshape(N_r, G * D1)            # free row-major re-lane view
    tn, grid = _pick_tiling(N_r, tn4_target)

    bias_r = jnp.tile(bias_full.astype(jnp.float32), G).reshape(1, G * DO)
    eye_g = jnp.eye(G, dtype=jnp.float32)
    compiler_params = pltpu.CompilerParams(dimension_semantics=("parallel",))

    if data_in2 is None:
        # forward(): data_in2 = ones_like(x1[:, :1]); with irreps_in2='1x0e'
        # the bilinear collapses to a single (N_r,128)@(128,128) matmul.
        assert D2 == 1, "data_in2=None implies irreps_in2='1x0e' (dim 1)"
        # w_bd[g*D1 + i, g*DO + k] = W3_eff[i, 0, k]
        w_bd = jnp.einsum("ik,gh->gihk", W3_eff[:, 0, :].astype(jnp.float32),
                          eye_g).reshape(G * D1, G * DO)
        out_r = pl.pallas_call(
            _o3_tp_matmul_kernel,
            out_shape=jax.ShapeDtypeStruct((N_r, G * DO), data_in1.dtype),
            grid_spec=pltpu.PrefetchScalarGridSpec(
                num_scalar_prefetch=0,
                grid=(grid,),
                in_specs=[
                    pl.BlockSpec((tn, G * D1), lambda i: (i, 0)),      # x1 tile
                    pl.BlockSpec((G * D1, G * DO), lambda i: (0, 0)),  # weight (resident)
                    pl.BlockSpec((1, G * DO), lambda i: (0, 0)),       # bias (resident)
                ],
                out_specs=pl.BlockSpec((tn, G * DO), lambda i: (i, 0)),
            ),
            compiler_params=compiler_params,
        )(x1_r, w_bd, bias_r)
    else:
        x2_r = x2.reshape(N_r, G * D2)
        # w_bd[j*G*D1 + g*D1 + i, g*DO + k] = W3_eff[i, j, k]
        w_bd = jnp.einsum("ijk,gh->jgihk", W3_eff.astype(jnp.float32),
                          eye_g).reshape(D2 * G * D1, G * DO)
        # Constant 0/1 spread matrix for the in-kernel x2 broadcast matmul.
        s_np = np.zeros((G * D2, D2 * G * D1), np.float32)
        for g in range(G):
            for j in range(D2):
                c0 = j * G * D1 + g * D1
                s_np[g * D2 + j, c0:c0 + D1] = 1.0
        s = jnp.asarray(s_np)

        out_r = pl.pallas_call(
            _o3_tp_bilinear_kernel,
            out_shape=jax.ShapeDtypeStruct((N_r, G * DO), data_in1.dtype),
            grid_spec=pltpu.PrefetchScalarGridSpec(
                num_scalar_prefetch=0,
                grid=(grid,),
                in_specs=[
                    pl.BlockSpec((tn, G * D1), lambda i: (i, 0)),           # x1 tile
                    pl.BlockSpec((tn, G * D2), lambda i: (i, 0)),           # x2 tile
                    pl.BlockSpec((G * D2, D2 * G * D1), lambda i: (0, 0)),  # spread (resident)
                    pl.BlockSpec((D2 * G * D1, G * DO), lambda i: (0, 0)),  # weight (resident)
                    pl.BlockSpec((1, G * DO), lambda i: (0, 0)),            # bias (resident)
                ],
                out_specs=pl.BlockSpec((tn, G * DO), lambda i: (i, 0)),
            ),
            compiler_params=compiler_params,
        )(x1_r, x2_r, s, w_bd, bias_r)

    out = out_r.reshape(Np, DO)               # free view back to (rows, DO)
    return out[:N] if rem else out


# ------------------------------------ main -----------------------------------
if __name__ == "__main__":
    key = jax.random.PRNGKey(0)
    k_x1, k_x2, k_w1, k_w2, k_xl1, k_xl2 = jax.random.split(key, 6)

    D1 = irreps_dim(IRREPS_IN1)    # 32
    D2 = irreps_dim(IRREPS_IN2)    # 4
    DO = irreps_dim(IRREPS_OUT)    # 32

    # ---- parameters (deterministic) ----
    W3, sqrt_k, bias = build_o3_tensor_product_params(
        k_w1, IRREPS_IN1, IRREPS_IN2, IRREPS_OUT, tp_rescale=True)
    W3_eff = fold_tp_rescale(W3, sqrt_k, tp_rescale=True)

    W3n, sqrt_kn, biasn = build_o3_tensor_product_params(
        k_w2, IRREPS_IN1, IRREPS_IN2_NONE, IRREPS_OUT, tp_rescale=True)
    W3n_eff = fold_tp_rescale(W3n, sqrt_kn, tp_rescale=True)

    # ---- bilinear path, small N (single full-block grid, no pad/slice) ----
    N = 1000
    data_in1 = jax.random.normal(k_x1, (N, D1), jnp.float32)
    data_in2 = jax.random.normal(k_x2, (N, D2), jnp.float32)

    out = jax.block_until_ready(o3_tensor_product(data_in1, data_in2, W3_eff, bias))
    ref = jnp.einsum("ni,nj,ijk->nk", data_in1, data_in2, W3) / sqrt_k + bias
    assert out.shape == (N, DO) and out.dtype == jnp.float32
    assert jnp.allclose(out, ref, atol=1e-4, rtol=1e-4), "bilinear path mismatch"

    # ---- data_in2=None path: module built with irreps_in2=None -> "1x0e" ----
    out_none = jax.block_until_ready(o3_tensor_product(data_in1, None, W3n_eff, biasn))
    ones = jnp.ones((N, 1), jnp.float32)
    ref_none = jnp.einsum("ni,nj,ijk->nk", data_in1, ones, W3n) / sqrt_kn + biasn
    assert jnp.allclose(out_none, ref_none, atol=1e-4, rtol=1e-4), "None-path mismatch"

    # ---- larger N: multi-step grid with a ragged (clipped) trailing block ----
    NL = 9000                        # N_r = 2250 -> tn = 288, grid = 8 (last block clipped)
    xl1 = jax.random.normal(k_xl1, (NL, D1), jnp.float32)
    xl2 = jax.random.normal(k_xl2, (NL, D2), jnp.float32)
    out_l = jax.block_until_ready(o3_tensor_product(xl1, xl2, W3_eff, bias))
    ref_l = jnp.einsum("ni,nj,ijk->nk", xl1, xl2, W3) / sqrt_k + bias
    assert out_l.shape == (NL, DO)
    assert jnp.allclose(out_l, ref_l, atol=1e-4, rtol=1e-4), "large-N path mismatch"

    print("KERNEL_OK")
</pallas_src>

<mosaic_0001>
module attributes {stable_mosaic.version = 11 : i64} {
  func.func @_o3_tp_bilinear_kernel(%arg0: i32, %arg1: memref<250x128xf32, #tpu.memory_space<vmem>>, %arg2: memref<250x16xf32, #tpu.memory_space<vmem>>, %arg3: memref<16x512xf32, #tpu.memory_space<vmem>>, %arg4: memref<512x128xf32, #tpu.memory_space<vmem>>, %arg5: memref<1x128xf32, #tpu.memory_space<vmem>>, %arg6: memref<250x128xf32, #tpu.memory_space<vmem>>) attributes {dimension_semantics = [#tpu.dimension_semantics<parallel>], iteration_bounds = array<i64: 1>, scalar_prefetch = 0 : i64, scratch_operands = 0 : i64, tpu.core_type = #tpu.core_type<tc>, window_params = [{transform_indices = @transform_0, window_bounds = array<i64: 250, 128>}, {transform_indices = @transform_1, window_bounds = array<i64: 250, 16>}, {pipeline_mode = #tpu.pipeline_mode<synchronous>, transform_indices = @transform_2, window_bounds = array<i64: 16, 512>}, {pipeline_mode = #tpu.pipeline_mode<synchronous>, transform_indices = @transform_3, window_bounds = array<i64: 512, 128>}, {pipeline_mode = #tpu.pipeline_mode<synchronous>, transform_indices = @transform_4, window_bounds = array<i64: 1, 128>}, {transform_indices = @transform_5, window_bounds = array<i64: 250, 128>}]} {
    %c0 = arith.constant 0 : index
    %c0_0 = arith.constant 0 : index
    %0 = vector.load %arg1[%c0, %c0_0] : memref<250x128xf32, #tpu.memory_space<vmem>>, vector<250x128xf32>
    %1 = tpu.concatenate %0, %0, %0, %0 in 1 : vector<250x128xf32>, vector<250x128xf32>, vector<250x128xf32>, vector<250x128xf32> -> vector<250x512xf32>
    %c0_1 = arith.constant 0 : index
    %c0_2 = arith.constant 0 : index
    %2 = vector.load %arg2[%c0_1, %c0_2] : memref<250x16xf32, #tpu.memory_space<vmem>>, vector<250x16xf32>
    %c0_3 = arith.constant 0 : index
    %c0_4 = arith.constant 0 : index
    %3 = vector.load %arg3[%c0_3, %c0_4] : memref<16x512xf32, #tpu.memory_space<vmem>>, vector<16x512xf32>
    %cst = arith.constant dense<0.000000e+00> : vector<250x512xf32>
    %4 = tpu.matmul %2, %3, %cst {dimension_numbers = #tpu.dot_dimension_numbers<[1], [0], [0], [1], [0, 0, 1, 1], [], []>} : vector<250x16xf32>, vector<16x512xf32>, vector<250x512xf32> -> vector<250x512xf32>
    %5 = arith.mulf %1, %4 : vector<250x512xf32>
    %c0_5 = arith.constant 0 : index
    %c0_6 = arith.constant 0 : index
    %6 = vector.load %arg4[%c0_5, %c0_6] : memref<512x128xf32, #tpu.memory_space<vmem>>, vector<512x128xf32>
    %cst_7 = arith.constant dense<0.000000e+00> : vector<250x128xf32>
    %7 = tpu.matmul %5, %6, %cst_7 {dimension_numbers = #tpu.dot_dimension_numbers<[1], [0], [0], [1], [0, 0, 1, 1], [], []>} : vector<250x512xf32>, vector<512x128xf32>, vector<250x128xf32> -> vector<250x128xf32>
    %c0_8 = arith.constant 0 : index
    %c0_9 = arith.constant 0 : index
    %8 = vector.load %arg5[%c0_8, %c0_9] : memref<1x128xf32, #tpu.memory_space<vmem>>, vector<1x128xf32>
    %9 = vector.broadcast %8 : vector<1x128xf32> to vector<250x128xf32>
    %10 = arith.addf %7, %9 : vector<250x128xf32>
    %c0_10 = arith.constant 0 : index
    %c0_11 = arith.constant 0 : index
    %11 = vector.load %arg6[%c0_10, %c0_11] : memref<250x128xf32, #tpu.memory_space<vmem>>, vector<250x128xf32>
    tpu.vector_store %arg6[%c0_10, %c0_11], %10 {strides = array<i32>} : memref<250x128xf32, #tpu.memory_space<vmem>>, vector<250x128xf32>,
    return
  }
  func.func @transform_0(%arg0: i32) -> (i32, i32) {
    %c0_i32 = arith.constant 0 : i32
    %c0_i32_0 = arith.constant 0 : i32
    return %arg0, %c0_i32 : i32, i32
  }
  func.func @transform_1(%arg0: i32) -> (i32, i32) {
    %c0_i32 = arith.constant 0 : i32
    %c0_i32_0 = arith.constant 0 : i32
    return %arg0, %c0_i32 : i32, i32
  }
  func.func @transform_2(%arg0: i32) -> (i32, i32) {
    %c0_i32 = arith.constant 0 : i32
    %c0_i32_0 = arith.constant 0 : i32
    %c0_i32_1 = arith.constant 0 : i32
    return %c0_i32, %c0_i32_0 : i32, i32
  }
  func.func @transform_3(%arg0: i32) -> (i32, i32) {
    %c0_i32 = arith.constant 0 : i32
    %c0_i32_0 = arith.constant 0 : i32
    %c0_i32_1 = arith.constant 0 : i32
    return %c0_i32, %c0_i32_0 : i32, i32
  }
  func.func @transform_4(%arg0: i32) -> (i32, i32) {
    %c0_i32 = arith.constant 0 : i32
    %c0_i32_0 = arith.constant 0 : i32
    %c0_i32_1 = arith.constant 0 : i32
    return %c0_i32, %c0_i32_0 : i32, i32
  }
  func.func @transform_5(%arg0: i32) -> (i32, i32) {
    %c0_i32 = arith.constant 0 : i32
    %c0_i32_0 = arith.constant 0 : i32
    return %arg0, %c0_i32 : i32, i32
  }
}

</mosaic_0001>

<llo_original>
// kernel: tpu_custom_call.1
$region0: #{tpu_custom_call.1}
  #allocation0 [shape = 'u32[]', space=smem, size = 0x4, offset = 0x4, fixed_abs, tag = 'smem constant byte address 0x4 - core index']
  #allocation1 [shape = 'u32[72,128]{1,0:T(1,128)}', space=vmem, size = 0x9000, scoped, tag = 'internal scratch']
  %s0 = inlined_call_operand.vmem [shape: f32[250,128], index: 0, kind: input, shape index: {}]
  %s1 = inlined_call_operand.vmem [shape: f32[250,16], index: 1, kind: input, shape index: {}]
  %s2 = inlined_call_operand.hbm [shape: f32[16,512], index: 2, kind: input, shape index: {}]
  %s3 = inlined_call_operand.hbm [shape: f32[512,128], index: 3, kind: input, shape index: {}]
  %s4 = inlined_call_operand.vmem [shape: f32[1,128], index: 4, kind: input, shape index: {}]
  %s5 = inlined_call_operand.hbm [shape: f32[250,128], index: 5, kind: output, shape index: {}]
  %s6 = sld [smem:[#allocation0]]
  $region38: #{tpu_custom_call.1} parent=0
    _
  %s8 = ssub.s32 1, %s6
  %s9 = scalar_select 0, %s8, %s6
  $region1: #{tpu_custom_call.1} parent=0
    #allocation2 [shape = 'u8[32768]{0}', space=vmem, size = 0x8000, scoped, tag = 'input window, operand 2, single buffered']
    #allocation3 [shape = 's32[1]{0}', space=sflag, size = 0x4, scoped, tag = 'scoped memory for tpu_custom_call.1']
    #allocation4 [shape = 's32[1]{0}', space=sflag, size = 0x4, scoped, tag = 'scoped memory for tpu_custom_call.1']
    #allocation5 [shape = 'u8[262144]{0}', space=vmem, size = 0x40000, scoped, tag = 'input window, operand 3, single buffered']
    #allocation6 [shape = 's32[1]{0}', space=sflag, size = 0x4, scoped, tag = 'scoped memory for tpu_custom_call.1']
    #allocation7 [shape = 'u8[131072]{0}', space=vmem, size = 0x20000, scoped, tag = 'output window, operand 0, single buffered']
    %10 = vsyncpa [#allocation3], 0
    %11 = vsyncpa [#allocation6], 0
    %12 = vsyncpa [#allocation4], 0
    // Predicated region
    $region2: #{tpu_custom_call.1} parent=1 // pred_check
      _
    $region3: #{tpu_custom_call.1} parent=1 // pred_check_branch
      %14 = sbr.rel (0) target = $region5
    $region4: #{tpu_custom_call.1} parent=1 // pred_region
      _
    $region5: #{tpu_custom_call.1} parent=1 // pred_fallthru
      _
    // Predicated region
    $region6: #{tpu_custom_call.1} parent=1 // pred_check
      _
    $region7: #{tpu_custom_call.1} parent=1 // pred_check_branch
      %16 = sbr.rel (0) target = $region9
    $region8: #{tpu_custom_call.1} parent=1 // pred_region
      _
    $region9: #{tpu_custom_call.1} parent=1 // pred_fallthru
      _
    // Predicated region
    $region10: #{tpu_custom_call.1} parent=1 // pred_check
      _
    $region11: #{tpu_custom_call.1} parent=1 // pred_check_branch
      %18 = sbr.rel (0) target = $region13
    $region12: #{tpu_custom_call.1} parent=1 // pred_region
      %20 = vsyncadd [#allocation3], 0
      %s21 = sshll.u32 %s2, 4
      %s22 = int_to_ptr.hbm [resolvable:$true] %s21
      %s23 = sshll.u32 [#allocation2], 4
      %s24 = int_to_ptr.vmem [resolvable:$true] %s23
      %29 = dma.hbm_to_vmem [thread:$0]  %s22, 1024, %s24, [#allocation3], 512, 512, 32
    $region13: #{tpu_custom_call.1} parent=1 // pred_fallthru
      _
    // Predicated region
    $region14: #{tpu_custom_call.1} parent=1 // pred_check
      _
    $region15: #{tpu_custom_call.1} parent=1 // pred_check_branch
      %31 = sbr.rel (0) target = $region17
    $region16: #{tpu_custom_call.1} parent=1 // pred_region
      %33 = vsyncadd [#allocation6], 0
      %s34 = sshll.u32 %s3, 4
      %s35 = int_to_ptr.hbm [resolvable:$true] %s34
      %s36 = sshll.u32 [#allocation5], 4
      %s37 = int_to_ptr.vmem [resolvable:$true] %s36
      %42 = dma.hbm_to_vmem [thread:$0]  %s35, 8192, %s37, [#allocation6], 128, 128, 8
    $region17: #{tpu_custom_call.1} parent=1 // pred_fallthru
      _
    // Predicated region
    $region18: #{tpu_custom_call.1} parent=1 // pred_check
      _
    $region19: #{tpu_custom_call.1} parent=1 // pred_check_branch
      %44 = sbr.rel (0) target = $region21
    $region20: #{tpu_custom_call.1} parent=1 // pred_region
      _
    $region21: #{tpu_custom_call.1} parent=1 // pred_fallthru
      _
    // Predicated region
    $region22: #{tpu_custom_call.1} parent=1 // pred_check
      _
    $region23: #{tpu_custom_call.1} parent=1 // pred_check_branch
      %46 = sbr.rel (0) target = $region25
    $region24: #{tpu_custom_call.1} parent=1 // pred_region
      %48 = dma.done [#allocation3], 1024
    $region25: #{tpu_custom_call.1} parent=1 // pred_fallthru
      _
    // Predicated region
    $region26: #{tpu_custom_call.1} parent=1 // pred_check
      _
    $region27: #{tpu_custom_call.1} parent=1 // pred_check_branch
      %50 = sbr.rel (0) target = $region29
    $region28: #{tpu_custom_call.1} parent=1 // pred_region
      %52 = dma.done [#allocation6], 8192
    $region29: #{tpu_custom_call.1} parent=1 // pred_fallthru
      _
    %v53 = vld [vmem:[%s0] sm:$0xff]
    %v54 = vld [vmem:[%s0 + $0x8] sm:$0xff]
    %v55 = vld [vmem:[%s0 + $0x10] sm:$0xff]
    %v56 = vld [vmem:[%s0 + $0x18] sm:$0xff]
    %v57 = vld [vmem:[%s0 + $0x20] sm:$0xff]
    %v58 = vld [vmem:[%s0 + $0x28] sm:$0xff]
    %v59 = vld [vmem:[%s0 + $0x30] sm:$0xff]
    %v60 = vld [vmem:[%s0 + $0x38] sm:$0xff]
    %v61 = vld [vmem:[%s0 + $0x40] sm:$0xff]
    %v62 = vld [vmem:[%s0 + $0x48] sm:$0xff]
    %v63 = vld [vmem:[%s0 + $0x50] sm:$0xff]
    %v64 = vld [vmem:[%s0 + $0x58] sm:$0xff]
    %v65 = vld [vmem:[%s0 + $0x60] sm:$0xff]
    %v66 = vld [vmem:[%s0 + $0x68] sm:$0xff]
    %v67 = vld [vmem:[%s0 + $0x70] sm:$0xff]
    %v68 = vld [vmem:[%s0 + $0x78] sm:$0xff]
    %v69 = vld [vmem:[%s0 + $0x80] sm:$0xff]
    %v70 = vld [vmem:[%s0 + $0x88] sm:$0xff]
    %v71 = vld [vmem:[%s0 + $0x90] sm:$0xff]
    %v72 = vld [vmem:[%s0 + $0x98] sm:$0xff]
    %v73 = vld [vmem:[%s0 + $0xa0] sm:$0xff]
    %v74 = vld [vmem:[%s0 + $0xa8] sm:$0xff]
    %v75 = vld [vmem:[%s0 + $0xb0] sm:$0xff]
    %v76 = vld [vmem:[%s0 + $0xb8] sm:$0xff]
    %v77 = vld [vmem:[%s0 + $0xc0] sm:$0xff]
    %v78 = vld [vmem:[%s0 + $0xc8] sm:$0xff]
    %v79 = vld [vmem:[%s0 + $0xd0] sm:$0xff]
    %v80 = vld [vmem:[%s0 + $0xd8] sm:$0xff]
    %v81 = vld [vmem:[%s0 + $0xe0] sm:$0xff]
    %v82 = vld [vmem:[%s0 + $0xe8] sm:$0xff]
    %v83 = vld [vmem:[%s0 + $0xf0] sm:$0xff]
    %v84 = vld [vmem:[%s0 + $0xf8] sm:$0x3]
    %v85 = vld [vmem:[%s1] sm:$0xff]
    %v86 = vld [vmem:[%s1 + $0x8] sm:$0xff]
    %v87 = vld [vmem:[%s1 + $0x10] sm:$0xff]
    %v88 = vld [vmem:[%s1 + $0x18] sm:$0xff]
    %v89 = vld [vmem:[%s1 + $0x20] sm:$0xff]
    %v90 = vld [vmem:[%s1 + $0x28] sm:$0xff]
    %v91 = vld [vmem:[%s1 + $0x30] sm:$0xff]
    %v92 = vld [vmem:[%s1 + $0x38] sm:$0xff]
    %v93 = vld [vmem:[%s1 + $0x40] sm:$0xff]
    %v94 = vld [vmem:[%s1 + $0x48] sm:$0xff]
    %v95 = vld [vmem:[%s1 + $0x50] sm:$0xff]
    %v96 = vld [vmem:[%s1 + $0x58] sm:$0xff]
    %v97 = vld [vmem:[%s1 + $0x60] sm:$0xff]
    %v98 = vld [vmem:[%s1 + $0x68] sm:$0xff]
    %v99 = vld [vmem:[%s1 + $0x70] sm:$0xff]
    %v100 = vld [vmem:[%s1 + $0x78] sm:$0xff]
    %v101 = vld [vmem:[%s1 + $0x80] sm:$0xff]
    %v102 = vld [vmem:[%s1 + $0x88] sm:$0xff]
    %v103 = vld [vmem:[%s1 + $0x90] sm:$0xff]
    %v104 = vld [vmem:[%s1 + $0x98] sm:$0xff]
    %v105 = vld [vmem:[%s1 + $0xa0] sm:$0xff]
    %v106 = vld [vmem:[%s1 + $0xa8] sm:$0xff]
    %v107 = vld [vmem:[%s1 + $0xb0] sm:$0xff]
    %v108 = vld [vmem:[%s1 + $0xb8] sm:$0xff]
    %v109 = vld [vmem:[%s1 + $0xc0] sm:$0xff]
    %v110 = vld [vmem:[%s1 + $0xc8] sm:$0xff]
    %v111 = vld [vmem:[%s1 + $0xd0] sm:$0xff]
    %v112 = vld [vmem:[%s1 + $0xd8] sm:$0xff]
    %v113 = vld [vmem:[%s1 + $0xe0] sm:$0xff]
    %v114 = vld [vmem:[%s1 + $0xe8] sm:$0xff]
    %v115 = vld [vmem:[%s1 + $0xf0] sm:$0xff]
    %v116 = vld [vmem:[%s1 + $0xf8] sm:$0x3]
    %v117 = vld [vmem:[#allocation2] sm:$0xff]
    %v118 = vld [vmem:[#allocation2 + $0x8] sm:$0xff]
    %v119 = vld [vmem:[#allocation2 + $0x10] sm:$0xff]
    %v120 = vld [vmem:[#allocation2 + $0x18] sm:$0xff]
    %v121 = vld [vmem:[#allocation2 + $0x20] sm:$0xff]
    %v122 = vld [vmem:[#allocation2 + $0x28] sm:$0xff]
    %v123 = vld [vmem:[#allocation2 + $0x30] sm:$0xff]
    %v124 = vld [vmem:[#allocation2 + $0x38] sm:$0xff]
    %vm125 = vcmask 130048
    %v127 = vsel %vm125, %v85, 0
    %v130 = vsel %vm125, %v86, 0
    %v133 = vsel %vm125, %v87, 0
    %v136 = vsel %vm125, %v88, 0
    %v139 = vsel %vm125, %v89, 0
    %v142 = vsel %vm125, %v90, 0
    %v145 = vsel %vm125, %v91, 0
    %v148 = vsel %vm125, %v92, 0
    %v151 = vsel %vm125, %v93, 0
    %v154 = vsel %vm125, %v94, 0
    %v157 = vsel %vm125, %v95, 0
    %v160 = vsel %vm125, %v96, 0
    %v163 = vsel %vm125, %v97, 0
    %v166 = vsel %vm125, %v98, 0
    %v169 = vsel %vm125, %v99, 0
    %v172 = vsel %vm125, %v100, 0
    %v175 = vsel %vm125, %v101, 0
    %v178 = vsel %vm125, %v102, 0
    %v181 = vsel %vm125, %v103, 0
    %v184 = vsel %vm125, %v104, 0
    %v187 = vsel %vm125, %v105, 0
    %v190 = vsel %vm125, %v106, 0
    %v193 = vsel %vm125, %v107, 0
    %v196 = vsel %vm125, %v108, 0
    %v199 = vsel %vm125, %v109, 0
    %v202 = vsel %vm125, %v110, 0
    %v205 = vsel %vm125, %v111, 0
    %v208 = vsel %vm125, %v112, 0
    %v211 = vsel %vm125, %v113, 0
    %v214 = vsel %vm125, %v114, 0
    %v217 = vsel %vm125, %v115, 0
    %v220 = vsel %vm125, %v116, 0
    %222 = vmatpush.msra.mxu0 0.0
    %223 = vmatpush.msra.mxu0 0.0
    %224 = vmatpush.msra.mxu0 0.0
    %225 = vmatpush.msra.mxu0 0.0
    %226 = vmatpush.msra.mxu0 0.0
    %227 = vmatpush.msra.mxu0 0.0
    %228 = vmatpush.msra.mxu0 0.0
    %229 = vmatpush.msra.mxu0 0.0
    %230 = vmatpush.msra.mxu0 0.0
    %231 = vmatpush.msra.mxu0 0.0
    %232 = vmatpush.msra.mxu0 0.0
    %233 = vmatpush.msra.mxu0 0.0
    %234 = vmatpush.msra.mxu0 0.0
    %235 = vmatpush.msra.mxu0 0.0
    %236 = vmatpush.msra.mxu0 %v121
    %237 = vmatpush.msra.mxu0 %v117
    %238 = vmatmul.f32.gmra.mxu0 %v127
    %v239 = vpop.f32.mrf.mxu0
    %v240 = vadd.f32 0.0, %v239
    %241 = vmatmul.f32.gmra.mxu0 %v130
    %v242 = vpop.f32.mrf.mxu0
    %v243 = vadd.f32 0.0, %v242
    %244 = vmatmul.f32.gmra.mxu0 %v133
    %v245 = vpop.f32.mrf.mxu0
    %v246 = vadd.f32 0.0, %v245
    %247 = vmatmul.f32.gmra.mxu0 %v136
    %v248 = vpop.f32.mrf.mxu0
    %v249 = vadd.f32 0.0, %v248
    %250 = vmatmul.f32.gmra.mxu0 %v139
    %v251 = vpop.f32.mrf.mxu0
    %v252 = vadd.f32 0.0, %v251
    %253 = vmatmul.f32.gmra.mxu0 %v142
    %v254 = vpop.f32.mrf.mxu0
    %v255 = vadd.f32 0.0, %v254
    %256 = vmatmul.f32.gmra.mxu0 %v145
    %v257 = vpop.f32.mrf.mxu0
    %v258 = vadd.f32 0.0, %v257
    %259 = vmatmul.f32.gmra.mxu0 %v148
    %v260 = vpop.f32.mrf.mxu0
    %v261 = vadd.f32 0.0, %v260
    %262 = vmatmul.f32.gmra.mxu0 %v151
    %v263 = vpop.f32.mrf.mxu0
    %v264 = vadd.f32 0.0, %v263
    %265 = vmatmul.f32.gmra.mxu0 %v154
    %v266 = vpop.f32.mrf.mxu0
    %v267 = vadd.f32 0.0, %v266
    %268 = vmatmul.f32.gmra.mxu0 %v157
    %v269 = vpop.f32.mrf.mxu0
    %v270 = vadd.f32 0.0, %v269
    %271 = vmatmul.f32.gmra.mxu0 %v160
    %v272 = vpop.f32.mrf.mxu0
    %v273 = vadd.f32 0.0, %v272
    %274 = vmatmul.f32.gmra.mxu0 %v163
    %v275 = vpop.f32.mrf.mxu0
    %v276 = vadd.f32 0.0, %v275
    %277 = vmatmul.f32.gmra.mxu0 %v166
    %v278 = vpop.f32.mrf.mxu0
    %v279 = vadd.f32 0.0, %v278
    %280 = vmatmul.f32.gmra.mxu0 %v169
    %v281 = vpop.f32.mrf.mxu0
    %v282 = vadd.f32 0.0, %v281
    %283 = vmatmul.f32.gmra.mxu0 %v172
    %v284 = vpop.f32.mrf.mxu0
    %v285 = vadd.f32 0.0, %v284
    %286 = vmatmul.f32.gmra.mxu0 %v175
    %v287 = vpop.f32.mrf.mxu0
    %v288 = vadd.f32 0.0, %v287
    %289 = vmatmul.f32.gmra.mxu0 %v178
    %v290 = vpop.f32.mrf.mxu0
    %v291 = vadd.f32 0.0, %v290
    %292 = vmatmul.f32.gmra.mxu0 %v181
    %v293 = vpop.f32.mrf.mxu0
    %v294 = vadd.f32 0.0, %v293
    %295 = vmatmul.f32.gmra.mxu0 %v184
    %v296 = vpop.f32.mrf.mxu0
    %v297 = vadd.f32 0.0, %v296
    %298 = vmatmul.f32.gmra.mxu0 %v187
    %v299 = vpop.f32.mrf.mxu0
    %v300 = vadd.f32 0.0, %v299
    %301 = vmatmul.f32.gmra.mxu0 %v190
    %v302 = vpop.f32.mrf.mxu0
    %v303 = vadd.f32 0.0, %v302
    %304 = vmatmul.f32.gmra.mxu0 %v193
    %v305 = vpop.f32.mrf.mxu0
    %v306 = vadd.f32 0.0, %v305
    %307 = vmatmul.f32.gmra.mxu0 %v196
    %v308 = vpop.f32.mrf.mxu0
    %v309 = vadd.f32 0.0, %v308
    %310 = vmatmul.f32.gmra.mxu0 %v199
    %v311 = vpop.f32.mrf.mxu0
    %v312 = vadd.f32 0.0, %v311
    %313 = vmatmul.f32.gmra.mxu0 %v202
    %v314 = vpop.f32.mrf.mxu0
    %v315 = vadd.f32 0.0, %v314
    %316 = vmatmul.f32.gmra.mxu0 %v205
    %v317 = vpop.f32.mrf.mxu0
    %v318 = vadd.f32 0.0, %v317
    %319 = vmatmul.f32.gmra.mxu0 %v208
    %v320 = vpop.f32.mrf.mxu0
    %v321 = vadd.f32 0.0, %v320
    %322 = vmatmul.f32.gmra.mxu0 %v211
    %v323 = vpop.f32.mrf.mxu0
    %v324 = vadd.f32 0.0, %v323
    %325 = vmatmul.f32.gmra.mxu0 %v214
    %v326 = vpop.f32.mrf.mxu0
    %v327 = vadd.f32 0.0, %v326
    %328 = vmatmul.f32.gmra.mxu0 %v217
    %v329 = vpop.f32.mrf.mxu0
    %v330 = vadd.f32 0.0, %v329
    %331 = vmatmul.f32.gmra.mxu0 %v220
    %v332 = vpop.f32.mrf.mxu0
    %v333 = vadd.f32 0.0, %v332
    %334 = vdwg.mxu0
    %335 = vmatpush.msra.mxu0 0.0
    %336 = vmatpush.msra.mxu0 0.0
    %337 = vmatpush.msra.mxu0 0.0
    %338 = vmatpush.msra.mxu0 0.0
    %339 = vmatpush.msra.mxu0 0.0
    %340 = vmatpush.msra.mxu0 0.0
    %341 = vmatpush.msra.mxu0 0.0
    %342 = vmatpush.msra.mxu0 0.0
    %343 = vmatpush.msra.mxu0 0.0
    %344 = vmatpush.msra.mxu0 0.0
    %345 = vmatpush.msra.mxu0 0.0
    %346 = vmatpush.msra.mxu0 0.0
    %347 = vmatpush.msra.mxu0 0.0
    %348 = vmatpush.msra.mxu0 0.0
    %349 = vmatpush.msra.mxu0 %v122
    %350 = vmatpush.msra.mxu0 %v118
    %351 = vmatmul.f32.gmra.mxu0 %v127
    %v352 = vpop.f32.mrf.mxu0
    %v353 = vadd.f32 0.0, %v352
    %354 = vmatmul.f32.gmra.mxu0 %v130
    %v355 = vpop.f32.mrf.mxu0
    %v356 = vadd.f32 0.0, %v355
    %357 = vmatmul.f32.gmra.mxu0 %v133
    %v358 = vpop.f32.mrf.mxu0
    %v359 = vadd.f32 0.0, %v358
    %360 = vmatmul.f32.gmra.mxu0 %v136
    %v361 = vpop.f32.mrf.mxu0
    %v362 = vadd.f32 0.0, %v361
    %363 = vmatmul.f32.gmra.mxu0 %v139
    %v364 = vpop.f32.mrf.mxu0
    %v365 = vadd.f32 0.0, %v364
    %366 = vmatmul.f32.gmra.mxu0 %v142
    %v367 = vpop.f32.mrf.mxu0
    %v368 = vadd.f32 0.0, %v367
    %369 = vmatmul.f32.gmra.mxu0 %v145
    %v370 = vpop.f32.mrf.mxu0
    %v371 = vadd.f32 0.0, %v370
    %372 = vmatmul.f32.gmra.mxu0 %v148
    %v373 = vpop.f32.mrf.mxu0
    %v374 = vadd.f32 0.0, %v373
    %375 = vmatmul.f32.gmra.mxu0 %v151
    %v376 = vpop.f32.mrf.mxu0
    %v377 = vadd.f32 0.0, %v376
    %378 = vmatmul.f32.gmra.mxu0 %v154
    %v379 = vpop.f32.mrf.mxu0
    %v380 = vadd.f32 0.0, %v379
    %381 = vmatmul.f32.gmra.mxu0 %v157
    %v382 = vpop.f32.mrf.mxu0
    %v383 = vadd.f32 0.0, %v382
    %384 = vmatmul.f32.gmra.mxu0 %v160
    %v385 = vpop.f32.mrf.mxu0
    %v386 = vadd.f32 0.0, %v385
    %387 = vmatmul.f32.gmra.mxu0 %v163
    %v388 = vpop.f32.mrf.mxu0
    %v389 = vadd.f32 0.0, %v388
    %390 = vmatmul.f32.gmra.mxu0 %v166
    %v391 = vpop.f32.mrf.mxu0
    %v392 = vadd.f32 0.0, %v391
    %393 = vmatmul.f32.gmra.mxu0 %v169
    %v394 = vpop.f32.mrf.mxu0
    %v395 = vadd.f32 0.0, %v394
    %396 = vmatmul.f32.gmra.mxu0 %v172
    %v397 = vpop.f32.mrf.mxu0
    %v398 = vadd.f32 0.0, %v397
    %399 = vmatmul.f32.gmra.mxu0 %v175
    %v400 = vpop.f32.mrf.mxu0
    %v401 = vadd.f32 0.0, %v400
    %402 = vmatmul.f32.gmra.mxu0 %v178
    %v403 = vpop.f32.mrf.mxu0
    %v404 = vadd.f32 0.0, %v403
    %405 = vmatmul.f32.gmra.mxu0 %v181
    %v406 = vpop.f32.mrf.mxu0
    %v407 = vadd.f32 0.0, %v406
    %408 = vmatmul.f32.gmra.mxu0 %v184
    %v409 = vpop.f32.mrf.mxu0
    %v410 = vadd.f32 0.0, %v409
    %411 = vmatmul.f32.gmra.mxu0 %v187
    %v412 = vpop.f32.mrf.mxu0
    %v413 = vadd.f32 0.0, %v412
    %414 = vmatmul.f32.gmra.mxu0 %v190
    %v415 = vpop.f32.mrf.mxu0
    %v416 = vadd.f32 0.0, %v415
    %417 = vmatmul.f32.gmra.mxu0 %v193
    %v418 = vpop.f32.mrf.mxu0
    %v419 = vadd.f32 0.0, %v418
    %420 = vmatmul.f32.gmra.mxu0 %v196
    %v421 = vpop.f32.mrf.mxu0
    %v422 = vadd.f32 0.0, %v421
    %423 = vmatmul.f32.gmra.mxu0 %v199
    %v424 = vpop.f32.mrf.mxu0
    %v425 = vadd.f32 0.0, %v424
    %426 = vmatmul.f32.gmra.mxu0 %v202
    %v427 = vpop.f32.mrf.mxu0
    %v428 = vadd.f32 0.0, %v427
    %429 = vmatmul.f32.gmra.mxu0 %v205
    %v430 = vpop.f32.mrf.mxu0
    %v431 = vadd.f32 0.0, %v430
    %432 = vmatmul.f32.gmra.mxu0 %v208
    %v433 = vpop.f32.mrf.mxu0
    %v434 = vadd.f32 0.0, %v433
    %435 = vmatmul.f32.gmra.mxu0 %v211
    %v436 = vpop.f32.mrf.mxu0
    %v437 = vadd.f32 0.0, %v436
    %438 = vmatmul.f32.gmra.mxu0 %v214
    %v439 = vpop.f32.mrf.mxu0
    %v440 = vadd.f32 0.0, %v439
    %441 = vmatmul.f32.gmra.mxu0 %v217
    %v442 = vpop.f32.mrf.mxu0
    %v443 = vadd.f32 0.0, %v442
    %444 = vmatmul.f32.gmra.mxu0 %v220
    %v445 = vpop.f32.mrf.mxu0
    %v446 = vadd.f32 0.0, %v445
    %447 = vdwg.mxu0
    %448 = vmatpush.msra.mxu0 0.0
    %449 = vmatpush.msra.mxu0 0.0
    %450 = vmatpush.msra.mxu0 0.0
    %451 = vmatpush.msra.mxu0 0.0
    %452 = vmatpush.msra.mxu0 0.0
    %453 = vmatpush.msra.mxu0 0.0
    %454 = vmatpush.msra.mxu0 0.0
    %455 = vmatpush.msra.mxu0 0.0
    %456 = vmatpush.msra.mxu0 0.0
    %457 = vmatpush.msra.mxu0 0.0
    %458 = vmatpush.msra.mxu0 0.0
    %459 = vmatpush.msra.mxu0 0.0
    %460 = vmatpush.msra.mxu0 0.0
    %461 = vmatpush.msra.mxu0 0.0
    %462 = vmatpush.msra.mxu0 %v123
    %463 = vmatpush.msra.mxu0 %v119
    %464 = vmatmul.f32.gmra.mxu0 %v127
    %v465 = vpop.f32.mrf.mxu0
    %v466 = vadd.f32 0.0, %v465
    %467 = vmatmul.f32.gmra.mxu0 %v130
    %v468 = vpop.f32.mrf.mxu0
    %v469 = vadd.f32 0.0, %v468
    %470 = vmatmul.f32.gmra.mxu0 %v133
    %v471 = vpop.f32.mrf.mxu0
    %v472 = vadd.f32 0.0, %v471
    %473 = vmatmul.f32.gmra.mxu0 %v136
    %v474 = vpop.f32.mrf.mxu0
    %v475 = vadd.f32 0.0, %v474
    %476 = vmatmul.f32.gmra.mxu0 %v139
    %v477 = vpop.f32.mrf.mxu0
    %v478 = vadd.f32 0.0, %v477
    %479 = vmatmul.f32.gmra.mxu0 %v142
    %v480 = vpop.f32.mrf.mxu0
    %v481 = vadd.f32 0.0, %v480
    %482 = vmatmul.f32.gmra.mxu0 %v145
    %v483 = vpop.f32.mrf.mxu0
    %v484 = vadd.f32 0.0, %v483
    %485 = vmatmul.f32.gmra.mxu0 %v148
    %v486 = vpop.f32.mrf.mxu0
    %v487 = vadd.f32 0.0, %v486
    %488 = vmatmul.f32.gmra.mxu0 %v151
    %v489 = vpop.f32.mrf.mxu0
    %v490 = vadd.f32 0.0, %v489
    %491 = vmatmul.f32.gmra.mxu0 %v154
    %v492 = vpop.f32.mrf.mxu0
    %v493 = vadd.f32 0.0, %v492
    %494 = vmatmul.f32.gmra.mxu0 %v157
    %v495 = vpop.f32.mrf.mxu0
    %v496 = vadd.f32 0.0, %v495
    %497 = vmatmul.f32.gmra.mxu0 %v160
    %v498 = vpop.f32.mrf.mxu0
    %v499 = vadd.f32 0.0, %v498
    %500 = vmatmul.f32.gmra.mxu0 %v163
    %v501 = vpop.f32.mrf.mxu0
    %v502 = vadd.f32 0.0, %v501
    %503 = vmatmul.f32.gmra.mxu0 %v166
    %v504 = vpop.f32.mrf.mxu0
    %v505 = vadd.f32 0.0, %v504
    %506 = vmatmul.f32.gmra.mxu0 %v169
    %v507 = vpop.f32.mrf.mxu0
    %v508 = vadd.f32 0.0, %v507
    %509 = vmatmul.f32.gmra.mxu0 %v172
    %v510 = vpop.f32.mrf.mxu0
    %v511 = vadd.f32 0.0, %v510
    %512 = vmatmul.f32.gmra.mxu0 %v175
    %v513 = vpop.f32.mrf.mxu0
    %v514 = vadd.f32 0.0, %v513
    %515 = vmatmul.f32.gmra.mxu0 %v178
    %v516 = vpop.f32.mrf.mxu0
    %v517 = vadd.f32 0.0, %v516
    %518 = vmatmul.f32.gmra.mxu0 %v181
    %v519 = vpop.f32.mrf.mxu0
    %v520 = vadd.f32 0.0, %v519
    %521 = vmatmul.f32.gmra.mxu0 %v184
    %v522 = vpop.f32.mrf.mxu0
    %v523 = vadd.f32 0.0, %v522
    %524 = vmatmul.f32.gmra.mxu0 %v187
    %v525 = vpop.f32.mrf.mxu0
    %v526 = vadd.f32 0.0, %v525
    %527 = vmatmul.f32.gmra.mxu0 %v190
    %v528 = vpop.f32.mrf.mxu0
    %v529 = vadd.f32 0.0, %v528
    %530 = vmatmul.f32.gmra.mxu0 %v193
    %v531 = vpop.f32.mrf.mxu0
    %v532 = vadd.f32 0.0, %v531
    %533 = vmatmul.f32.gmra.mxu0 %v196
    %v534 = vpop.f32.mrf.mxu0
    %v535 = vadd.f32 0.0, %v534
    %536 = vmatmul.f32.gmra.mxu0 %v199
    %v537 = vpop.f32.mrf.mxu0
    %v538 = vadd.f32 0.0, %v537
    %539 = vmatmul.f32.gmra.mxu0 %v202
    %v540 = vpop.f32.mrf.mxu0
    %v541 = vadd.f32 0.0, %v540
    %542 = vmatmul.f32.gmra.mxu0 %v205
    %v543 = vpop.f32.mrf.mxu0
    %v544 = vadd.f32 0.0, %v543
    %545 = vmatmul.f32.gmra.mxu0 %v208
    %v546 = vpop.f32.mrf.mxu0
    %v547 = vadd.f32 0.0, %v546
    %548 = vmatmul.f32.gmra.mxu0 %v211
    %v549 = vpop.f32.mrf.mxu0
    %v550 = vadd.f32 0.0, %v549
    %551 = vmatmul.f32.gmra.mxu0 %v214
    %v552 = vpop.f32.mrf.mxu0
    %v553 = vadd.f32 0.0, %v552
    %554 = vmatmul.f32.gmra.mxu0 %v217
    %v555 = vpop.f32.mrf.mxu0
    %v556 = vadd.f32 0.0, %v555
    %557 = vmatmul.f32.gmra.mxu0 %v220
    %v558 = vpop.f32.mrf.mxu0
    %v559 = vadd.f32 0.0, %v558
    %560 = vdwg.mxu0
    %561 = vmatpush.msra.mxu0 0.0
    %562 = vmatpush.msra.mxu0 0.0
    %563 = vmatpush.msra.mxu0 0.0
    %564 = vmatpush.msra.mxu0 0.0
    %565 = vmatpush.msra.mxu0 0.0
    %566 = vmatpush.msra.mxu0 0.0
    %567 = vmatpush.msra.mxu0 0.0
    %568 = vmatpush.msra.mxu0 0.0
    %569 = vmatpush.msra.mxu0 0.0
    %570 = vmatpush.msra.mxu0 0.0
    %571 = vmatpush.msra.mxu0 0.0
    %572 = vmatpush.msra.mxu0 0.0
    %573 = vmatpush.msra.mxu0 0.0
    %574 = vmatpush.msra.mxu0 0.0
    %575 = vmatpush.msra.mxu0 %v124
    %576 = vmatpush.msra.mxu0 %v120
    %577 = vmatmul.f32.gmra.mxu0 %v127
    %v578 = vpop.f32.mrf.mxu0
    %v579 = vadd.f32 0.0, %v578
    %580 = vmatmul.f32.gmra.mxu0 %v130
    %v581 = vpop.f32.mrf.mxu0
    %v582 = vadd.f32 0.0, %v581
    %583 = vmatmul.f32.gmra.mxu0 %v133
    %v584 = vpop.f32.mrf.mxu0
    %v585 = vadd.f32 0.0, %v584
    %586 = vmatmul.f32.gmra.mxu0 %v136
    %v587 = vpop.f32.mrf.mxu0
    %v588 = vadd.f32 0.0, %v587
    %589 = vmatmul.f32.gmra.mxu0 %v139
    %v590 = vpop.f32.mrf.mxu0
    %v591 = vadd.f32 0.0, %v590
    %592 = vmatmul.f32.gmra.mxu0 %v142
    %v593 = vpop.f32.mrf.mxu0
    %v594 = vadd.f32 0.0, %v593
    %595 = vmatmul.f32.gmra.mxu0 %v145
    %v596 = vpop.f32.mrf.mxu0
    %v597 = vadd.f32 0.0, %v596
    %598 = vmatmul.f32.gmra.mxu0 %v148
    %v599 = vpop.f32.mrf.mxu0
    %v600 = vadd.f32 0.0, %v599
    %601 = vmatmul.f32.gmra.mxu0 %v151
    %v602 = vpop.f32.mrf.mxu0
    %v603 = vadd.f32 0.0, %v602
    %604 = vmatmul.f32.gmra.mxu0 %v154
    %v605 = vpop.f32.mrf.mxu0
    %v606 = vadd.f32 0.0, %v605
    %607 = vmatmul.f32.gmra.mxu0 %v157
    %v608 = vpop.f32.mrf.mxu0
    %v609 = vadd.f32 0.0, %v608
    %610 = vmatmul.f32.gmra.mxu0 %v160
    %v611 = vpop.f32.mrf.mxu0
    %v612 = vadd.f32 0.0, %v611
    %613 = vmatmul.f32.gmra.mxu0 %v163
    %v614 = vpop.f32.mrf.mxu0
    %v615 = vadd.f32 0.0, %v614
    %616 = vmatmul.f32.gmra.mxu0 %v166
    %v617 = vpop.f32.mrf.mxu0
    %v618 = vadd.f32 0.0, %v617
    %619 = vmatmul.f32.gmra.mxu0 %v169
    %v620 = vpop.f32.mrf.mxu0
    %v621 = vadd.f32 0.0, %v620
    %622 = vmatmul.f32.gmra.mxu0 %v172
    %v623 = vpop.f32.mrf.mxu0
    %v624 = vadd.f32 0.0, %v623
    %625 = vmatmul.f32.gmra.mxu0 %v175
    %v626 = vpop.f32.mrf.mxu0
    %v627 = vadd.f32 0.0, %v626
    %628 = vmatmul.f32.gmra.mxu0 %v178
    %v629 = vpop.f32.mrf.mxu0
    %v630 = vadd.f32 0.0, %v629
    %631 = vmatmul.f32.gmra.mxu0 %v181
    %v632 = vpop.f32.mrf.mxu0
    %v633 = vadd.f32 0.0, %v632
    %634 = vmatmul.f32.gmra.mxu0 %v184
    %v635 = vpop.f32.mrf.mxu0
    %v636 = vadd.f32 0.0, %v635
    %637 = vmatmul.f32.gmra.mxu0 %v187
    %v638 = vpop.f32.mrf.mxu0
    %v639 = vadd.f32 0.0, %v638
    %640 = vmatmul.f32.gmra.mxu0 %v190
    %v641 = vpop.f32.mrf.mxu0
    %v642 = vadd.f32 0.0, %v641
    %643 = vmatmul.f32.gmra.mxu0 %v193
    %v644 = vpop.f32.mrf.mxu0
    %v645 = vadd.f32 0.0, %v644
    %646 = vmatmul.f32.gmra.mxu0 %v196
    %v647 = vpop.f32.mrf.mxu0
    %v648 = vadd.f32 0.0, %v647
    %649 = vmatmul.f32.gmra.mxu0 %v199
    %v650 = vpop.f32.mrf.mxu0
    %v651 = vadd.f32 0.0, %v650
    %652 = vmatmul.f32.gmra.mxu0 %v202
    %v653 = vpop.f32.mrf.mxu0
    %v654 = vadd.f32 0.0, %v653
    %655 = vmatmul.f32.gmra.mxu0 %v205
    %v656 = vpop.f32.mrf.mxu0
    %v657 = vadd.f32 0.0, %v656
    %658 = vmatmul.f32.gmra.mxu0 %v208
    %v659 = vpop.f32.mrf.mxu0
    %v660 = vadd.f32 0.0, %v659
    %661 = vmatmul.f32.gmra.mxu0 %v211
    %v662 = vpop.f32.mrf.mxu0
    %v663 = vadd.f32 0.0, %v662
    %664 = vmatmul.f32.gmra.mxu0 %v214
    %v665 = vpop.f32.mrf.mxu0
    %v666 = vadd.f32 0.0, %v665
    %667 = vmatmul.f32.gmra.mxu0 %v217
    %v668 = vpop.f32.mrf.mxu0
    %v669 = vadd.f32 0.0, %v668
    %670 = vmatmul.f32.gmra.mxu0 %v220
    %v671 = vpop.f32.mrf.mxu0
    %v672 = vadd.f32 0.0, %v671
    %673 = vdwg.mxu0
    %v674 = vmul.f32 %v53, %v240
    %v675 = vmul.f32 %v53, %v353
    %v676 = vmul.f32 %v53, %v466
    %v677 = vmul.f32 %v53, %v579
    %v678 = vmul.f32 %v54, %v243
    %v679 = vmul.f32 %v54, %v356
    %v680 = vmul.f32 %v54, %v469
    %v681 = vmul.f32 %v54, %v582
    %v682 = vmul.f32 %v55, %v246
    %v683 = vmul.f32 %v55, %v359
    %v684 = vmul.f32 %v55, %v472
    %v685 = vmul.f32 %v55, %v585
    %v686 = vmul.f32 %v56, %v249
    %v687 = vmul.f32 %v56, %v362
    %v688 = vmul.f32 %v56, %v475
    %v689 = vmul.f32 %v56, %v588
    %v690 = vmul.f32 %v57, %v252
    %v691 = vmul.f32 %v57, %v365
    %v692 = vmul.f32 %v57, %v478
    %v693 = vmul.f32 %v57, %v591
    %v694 = vmul.f32 %v58, %v255
    %v695 = vmul.f32 %v58, %v368
    %v696 = vmul.f32 %v58, %v481
    %v697 = vmul.f32 %v58, %v594
    %v698 = vmul.f32 %v59, %v258
    %v699 = vmul.f32 %v59, %v371
    %v700 = vmul.f32 %v59, %v484
    %v701 = vmul.f32 %v59, %v597
    %v702 = vmul.f32 %v60, %v261
    %v703 = vmul.f32 %v60, %v374
    %v704 = vmul.f32 %v60, %v487
    %v705 = vmul.f32 %v60, %v600
    %v706 = vmul.f32 %v61, %v264
    %v707 = vmul.f32 %v61, %v377
    %v708 = vmul.f32 %v61, %v490
    %v709 = vmul.f32 %v61, %v603
    %v710 = vmul.f32 %v62, %v267
    %v711 = vmul.f32 %v62, %v380
    %v712 = vmul.f32 %v62, %v493
    %v713 = vmul.f32 %v62, %v606
    %v714 = vmul.f32 %v63, %v270
    %v715 = vmul.f32 %v63, %v383
    %v716 = vmul.f32 %v63, %v496
    %v717 = vmul.f32 %v63, %v609
    %v718 = vmul.f32 %v64, %v273
    %v719 = vmul.f32 %v64, %v386
    %v720 = vmul.f32 %v64, %v499
    %v721 = vmul.f32 %v64, %v612
    %v722 = vmul.f32 %v65, %v276
    %v723 = vmul.f32 %v65, %v389
    %v724 = vmul.f32 %v65, %v502
    %v725 = vmul.f32 %v65, %v615
    %v726 = vmul.f32 %v66, %v279
    %v727 = vmul.f32 %v66, %v392
    %v728 = vmul.f32 %v66, %v505
    %v729 = vmul.f32 %v66, %v618
    %v730 = vmul.f32 %v67, %v282
    %v731 = vmul.f32 %v67, %v395
    %v732 = vmul.f32 %v67, %v508
    %v733 = vmul.f32 %v67, %v621
    %v734 = vmul.f32 %v68, %v285
    %v735 = vmul.f32 %v68, %v398
    %v736 = vmul.f32 %v68, %v511
    %v737 = vmul.f32 %v68, %v624
    %v738 = vmul.f32 %v69, %v288
    %v739 = vmul.f32 %v69, %v401
    %v740 = vmul.f32 %v69, %v514
    %v741 = vmul.f32 %v69, %v627
    %v742 = vmul.f32 %v70, %v291
    %v743 = vmul.f32 %v70, %v404
    %v744 = vmul.f32 %v70, %v517
    %v745 = vmul.f32 %v70, %v630
    %v746 = vmul.f32 %v71, %v294
    %v747 = vmul.f32 %v71, %v407
    %v748 = vmul.f32 %v71, %v520
    %v749 = vmul.f32 %v71, %v633
    %v750 = vmul.f32 %v72, %v297
    %v751 = vmul.f32 %v72, %v410
    %v752 = vmul.f32 %v72, %v523
    %v753 = vmul.f32 %v72, %v636
    %v754 = vmul.f32 %v73, %v300
    %v755 = vmul.f32 %v73, %v413
    %v756 = vmul.f32 %v73, %v526
    %v757 = vmul.f32 %v73, %v639
    %v758 = vmul.f32 %v74, %v303
    %v759 = vmul.f32 %v74, %v416
    %v760 = vmul.f32 %v74, %v529
    %v761 = vmul.f32 %v74, %v642
    %v762 = vmul.f32 %v75, %v306
    %v763 = vmul.f32 %v75, %v419
    %v764 = vmul.f32 %v75, %v532
    %v765 = vmul.f32 %v75, %v645
    %v766 = vmul.f32 %v76, %v309
    %v767 = vmul.f32 %v76, %v422
    %v768 = vmul.f32 %v76, %v535
    %v769 = vmul.f32 %v76, %v648
    %v770 = vmul.f32 %v77, %v312
    %v771 = vmul.f32 %v77, %v425
    %v772 = vmul.f32 %v77, %v538
    %v773 = vmul.f32 %v77, %v651
    %v774 = vmul.f32 %v78, %v315
    %v775 = vmul.f32 %v78, %v428
    %v776 = vmul.f32 %v78, %v541
    %v777 = vmul.f32 %v78, %v654
    %v778 = vmul.f32 %v79, %v318
    %v779 = vmul.f32 %v79, %v431
    %v780 = vmul.f32 %v79, %v544
    %v781 = vmul.f32 %v79, %v657
    %v782 = vmul.f32 %v80, %v321
    %v783 = vmul.f32 %v80, %v434
    %v784 = vmul.f32 %v80, %v547
    %v785 = vmul.f32 %v80, %v660
    %v786 = vmul.f32 %v81, %v324
    %v787 = vmul.f32 %v81, %v437
    %v788 = vmul.f32 %v81, %v550
    %v789 = vmul.f32 %v81, %v663
    %v790 = vmul.f32 %v82, %v327
    %v791 = vmul.f32 %v82, %v440
    %v792 = vmul.f32 %v82, %v553
    %v793 = vmul.f32 %v82, %v666
    %v794 = vmul.f32 %v83, %v330
    %v795 = vmul.f32 %v83, %v443
    %v796 = vmul.f32 %v83, %v556
    %v797 = vmul.f32 %v83, %v669
    %v798 = vmul.f32 %v84, %v333
    %v799 = vmul.f32 %v84, %v446
    %v800 = vmul.f32 %v84, %v559
    %v801 = vmul.f32 %v84, %v672
    %v802 = vld [vmem:[#allocation5] sm:$0xff]
    %v803 = vld [vmem:[#allocation5 + $0x8] sm:$0xff]
    %v804 = vld [vmem:[#allocation5 + $0x10] sm:$0xff]
    %v805 = vld [vmem:[#allocation5 + $0x18] sm:$0xff]
    %v806 = vld [vmem:[#allocation5 + $0x20] sm:$0xff]
    %v807 = vld [vmem:[#allocation5 + $0x28] sm:$0xff]
    %v808 = vld [vmem:[#allocation5 + $0x30] sm:$0xff]
    %v809 = vld [vmem:[#allocation5 + $0x38] sm:$0xff]
    %v810 = vld [vmem:[#allocation5 + $0x40] sm:$0xff]
    %v811 = vld [vmem:[#allocation5 + $0x48] sm:$0xff]
    %v812 = vld [vmem:[#allocation5 + $0x50] sm:$0xff]
    %v813 = vld [vmem:[#allocation5 + $0x58] sm:$0xff]
    %v814 = vld [vmem:[#allocation5 + $0x60] sm:$0xff]
    %v815 = vld [vmem:[#allocation5 + $0x68] sm:$0xff]
    %v816 = vld [vmem:[#allocation5 + $0x70] sm:$0xff]
    %v817 = vld [vmem:[#allocation5 + $0x78] sm:$0xff]
    %v818 = vld [vmem:[#allocation5 + $0x80] sm:$0xff]
    %v819 = vld [vmem:[#allocation5 + $0x88] sm:$0xff]
    %v820 = vld [vmem:[#allocation5 + $0x90] sm:$0xff]
    %v821 = vld [vmem:[#allocation5 + $0x98] sm:$0xff]
    %v822 = vld [vmem:[#allocation5 + $0xa0] sm:$0xff]
    %v823 = vld [vmem:[#allocation5 + $0xa8] sm:$0xff]
    %v824 = vld [vmem:[#allocation5 + $0xb0] sm:$0xff]
    %v825 = vld [vmem:[#allocation5 + $0xb8] sm:$0xff]
    %v826 = vld [vmem:[#allocation5 + $0xc0] sm:$0xff]
    %v827 = vld [vmem:[#allocation5 + $0xc8] sm:$0xff]
    %v828 = vld [vmem:[#allocation5 + $0xd0] sm:$0xff]
    %v829 = vld [vmem:[#allocation5 + $0xd8] sm:$0xff]
    %v830 = vld [vmem:[#allocation5 + $0xe0] sm:$0xff]
    %v831 = vld [vmem:[#allocation5 + $0xe8] sm:$0xff]
    %v832 = vld [vmem:[#allocation5 + $0xf0] sm:$0xff]
    %v833 = vld [vmem:[#allocation5 + $0xf8] sm:$0xff]
    %v834 = vld [vmem:[#allocation5 + $0x100] sm:$0xff]
    %v835 = vld [vmem:[#allocation5 + $0x108] sm:$0xff]
    %v836 = vld [vmem:[#allocation5 + $0x110] sm:$0xff]
    %v837 = vld [vmem:[#allocation5 + $0x118] sm:$0xff]
    %v838 = vld [vmem:[#allocation5 + $0x120] sm:$0xff]
    %v839 = vld [vmem:[#allocation5 + $0x128] sm:$0xff]
    %v840 = vld [vmem:[#allocation5 + $0x130] sm:$0xff]
    %v841 = vld [vmem:[#allocation5 + $0x138] sm:$0xff]
    %v842 = vld [vmem:[#allocation5 + $0x140] sm:$0xff]
    %v843 = vld [vmem:[#allocation5 + $0x148] sm:$0xff]
    %v844 = vld [vmem:[#allocation5 + $0x150] sm:$0xff]
    %v845 = vld [vmem:[#allocation5 + $0x158] sm:$0xff]
    %v846 = vld [vmem:[#allocation5 + $0x160] sm:$0xff]
    %v847 = vld [vmem:[#allocation5 + $0x168] sm:$0xff]
    %v848 = vld [vmem:[#allocation5 + $0x170] sm:$0xff]
    %v849 = vld [vmem:[#allocation5 + $0x178] sm:$0xff]
    %v850 = vld [vmem:[#allocation5 + $0x180] sm:$0xff]
    %v851 = vld [vmem:[#allocation5 + $0x188] sm:$0xff]
    %v852 = vld [vmem:[#allocation5 + $0x190] sm:$0xff]
    %v853 = vld [vmem:[#allocation5 + $0x198] sm:$0xff]
    %v854 = vld [vmem:[#allocation5 + $0x1a0] sm:$0xff]
    %v855 = vld [vmem:[#allocation5 + $0x1a8] sm:$0xff]
    %v856 = vld [vmem:[#allocation5 + $0x1b0] sm:$0xff]
    %v857 = vld [vmem:[#allocation5 + $0x1b8] sm:$0xff]
    %v858 = vld [vmem:[#allocation5 + $0x1c0] sm:$0xff]
    %v859 = vld [vmem:[#allocation5 + $0x1c8] sm:$0xff]
    %v860 = vld [vmem:[#allocation5 + $0x1d0] sm:$0xff]
    %v861 = vld [vmem:[#allocation5 + $0x1d8] sm:$0xff]
    %v862 = vld [vmem:[#allocation5 + $0x1e0] sm:$0xff]
    %v863 = vld [vmem:[#allocation5 + $0x1e8] sm:$0xff]
    %v864 = vld [vmem:[#allocation5 + $0x1f0] sm:$0xff]
    %v865 = vld [vmem:[#allocation5 + $0x1f8] sm:$0xff]
    %v866 = vld [vmem:[%s4] sm:$0x1]
    %v868 = vperm.slane %v866, 0
    %870 = vmatpush.msra.mxu0 %v817
    %871 = vmatpush.msra.mxu0 %v816
    %872 = vmatpush.msra.mxu0 %v815
    %873 = vmatpush.msra.mxu0 %v814
    %874 = vmatpush.msra.mxu0 %v813
    %875 = vmatpush.msra.mxu0 %v812
    %876 = vmatpush.msra.mxu0 %v811
    %877 = vmatpush.msra.mxu0 %v810
    %878 = vmatpush.msra.mxu0 %v809
    %879 = vmatpush.msra.mxu0 %v808
    %880 = vmatpush.msra.mxu0 %v807
    %881 = vmatpush.msra.mxu0 %v806
    %882 = vmatpush.msra.mxu0 %v805
    %883 = vmatpush.msra.mxu0 %v804
    %884 = vmatpush.msra.mxu0 %v803
    %885 = vmatpush.msra.mxu0 %v802
    %886 = vmatmul.f32.gmra.mxu0 %v674
    %v887 = vpop.f32.mrf.mxu0
    %v888 = vadd.f32 %v868, %v887
    %889 = vmatmul.f32.gmra.mxu0 %v678
    %v890 = vpop.f32.mrf.mxu0
    %v891 = vadd.f32 %v868, %v890
    %892 = vmatmul.f32.gmra.mxu0 %v682
    %v893 = vpop.f32.mrf.mxu0
    %v894 = vadd.f32 %v868, %v893
    %895 = vmatmul.f32.gmra.mxu0 %v686
    %v896 = vpop.f32.mrf.mxu0
    %v897 = vadd.f32 %v868, %v896
    %898 = vmatmul.f32.gmra.mxu0 %v690
    %v899 = vpop.f32.mrf.mxu0
    %v900 = vadd.f32 %v868, %v899
    %901 = vmatmul.f32.gmra.mxu0 %v694
    %v902 = vpop.f32.mrf.mxu0
    %v903 = vadd.f32 %v868, %v902
    %904 = vmatmul.f32.gmra.mxu0 %v698
    %v905 = vpop.f32.mrf.mxu0
    %v906 = vadd.f32 %v868, %v905
    %907 = vmatmul.f32.gmra.mxu0 %v702
    %v908 = vpop.f32.mrf.mxu0
    %v909 = vadd.f32 %v868, %v908
    %910 = vmatmul.f32.gmra.mxu0 %v706
    %v911 = vpop.f32.mrf.mxu0
    %v912 = vadd.f32 %v868, %v911
    %913 = vmatmul.f32.gmra.mxu0 %v710
    %v914 = vpop.f32.mrf.mxu0
    %v915 = vadd.f32 %v868, %v914
    %916 = vmatmul.f32.gmra.mxu0 %v714
    %v917 = vpop.f32.mrf.mxu0
    %v918 = vadd.f32 %v868, %v917
    %919 = vmatmul.f32.gmra.mxu0 %v718
    %v920 = vpop.f32.mrf.mxu0
    %v921 = vadd.f32 %v868, %v920
    %922 = vmatmul.f32.gmra.mxu0 %v722
    %v923 = vpop.f32.mrf.mxu0
    %v924 = vadd.f32 %v868, %v923
    %925 = vmatmul.f32.gmra.mxu0 %v726
    %v926 = vpop.f32.mrf.mxu0
    %v927 = vadd.f32 %v868, %v926
    %928 = vmatmul.f32.gmra.mxu0 %v730
    %v929 = vpop.f32.mrf.mxu0
    %v930 = vadd.f32 %v868, %v929
    %931 = vmatmul.f32.gmra.mxu0 %v734
    %v932 = vpop.f32.mrf.mxu0
    %v933 = vadd.f32 %v868, %v932
    %934 = vmatmul.f32.gmra.mxu0 %v738
    %v935 = vpop.f32.mrf.mxu0
    %v936 = vadd.f32 %v868, %v935
    %937 = vmatmul.f32.gmra.mxu0 %v742
    %v938 = vpop.f32.mrf.mxu0
    %v939 = vadd.f32 %v868, %v938
    %940 = vmatmul.f32.gmra.mxu0 %v746
    %v941 = vpop.f32.mrf.mxu0
    %v942 = vadd.f32 %v868, %v941
    %943 = vmatmul.f32.gmra.mxu0 %v750
    %v944 = vpop.f32.mrf.mxu0
    %v945 = vadd.f32 %v868, %v944
    %946 = vmatmul.f32.gmra.mxu0 %v754
    %v947 = vpop.f32.mrf.mxu0
    %v948 = vadd.f32 %v868, %v947
    %949 = vmatmul.f32.gmra.mxu0 %v758
    %v950 = vpop.f32.mrf.mxu0
    %v951 = vadd.f32 %v868, %v950
    %952 = vmatmul.f32.gmra.mxu0 %v762
    %v953 = vpop.f32.mrf.mxu0
    %v954 = vadd.f32 %v868, %v953
    %955 = vmatmul.f32.gmra.mxu0 %v766
    %v956 = vpop.f32.mrf.mxu0
    %v957 = vadd.f32 %v868, %v956
    %958 = vmatmul.f32.gmra.mxu0 %v770
    %v959 = vpop.f32.mrf.mxu0
    %v960 = vadd.f32 %v868, %v959
    %961 = vmatmul.f32.gmra.mxu0 %v774
    %v962 = vpop.f32.mrf.mxu0
    %v963 = vadd.f32 %v868, %v962
    %964 = vmatmul.f32.gmra.mxu0 %v778
    %v965 = vpop.f32.mrf.mxu0
    %v966 = vadd.f32 %v868, %v965
    %967 = vmatmul.f32.gmra.mxu0 %v782
    %v968 = vpop.f32.mrf.mxu0
    %v969 = vadd.f32 %v868, %v968
    %970 = vmatmul.f32.gmra.mxu0 %v786
    %v971 = vpop.f32.mrf.mxu0
    %v972 = vadd.f32 %v868, %v971
    %973 = vmatmul.f32.gmra.mxu0 %v790
    %v974 = vpop.f32.mrf.mxu0
    %v975 = vadd.f32 %v868, %v974
    %976 = vmatmul.f32.gmra.mxu0 %v794
    %v977 = vpop.f32.mrf.mxu0
    %v978 = vadd.f32 %v868, %v977
    %979 = vmatmul.f32.gmra.mxu0 %v798
    %v980 = vpop.f32.mrf.mxu0
    %v981 = vadd.f32 %v868, %v980
    %982 = vdwg.mxu0
    %983 = vmatpush.msra.mxu0 %v833
    %984 = vmatpush.msra.mxu0 %v832
    %985 = vmatpush.msra.mxu0 %v831
    %986 = vmatpush.msra.mxu0 %v830
    %987 = vmatpush.msra.mxu0 %v829
    %988 = vmatpush.msra.mxu0 %v828
    %989 = vmatpush.msra.mxu0 %v827
    %990 = vmatpush.msra.mxu0 %v826
    %991 = vmatpush.msra.mxu0 %v825
    %992 = vmatpush.msra.mxu0 %v824
    %993 = vmatpush.msra.mxu0 %v823
    %994 = vmatpush.msra.mxu0 %v822
    %995 = vmatpush.msra.mxu0 %v821
    %996 = vmatpush.msra.mxu0 %v820
    %997 = vmatpush.msra.mxu0 %v819
    %998 = vmatpush.msra.mxu0 %v818
    %999 = vmatmul.f32.gmra.mxu0 %v675
    %v1000 = vpop.f32.mrf.mxu0
    %v1001 = vadd.f32 %v888, %v1000
    %1002 = vmatmul.f32.gmra.mxu0 %v679
    %v1003 = vpop.f32.mrf.mxu0
    %v1004 = vadd.f32 %v891, %v1003
    %1005 = vmatmul.f32.gmra.mxu0 %v683
    %v1006 = vpop.f32.mrf.mxu0
    %v1007 = vadd.f32 %v894, %v1006
    %1008 = vmatmul.f32.gmra.mxu0 %v687
    %v1009 = vpop.f32.mrf.mxu0
    %v1010 = vadd.f32 %v897, %v1009
    %1011 = vmatmul.f32.gmra.mxu0 %v691
    %v1012 = vpop.f32.mrf.mxu0
    %v1013 = vadd.f32 %v900, %v1012
    %1014 = vmatmul.f32.gmra.mxu0 %v695
    %v1015 = vpop.f32.mrf.mxu0
    %v1016 = vadd.f32 %v903, %v1015
    %1017 = vmatmul.f32.gmra.mxu0 %v699
    %v1018 = vpop.f32.mrf.mxu0
    %v1019 = vadd.f32 %v906, %v1018
    %1020 = vmatmul.f32.gmra.mxu0 %v703
    %v1021 = vpop.f32.mrf.mxu0
    %v1022 = vadd.f32 %v909, %v1021
    %1023 = vmatmul.f32.gmra.mxu0 %v707
    %v1024 = vpop.f32.mrf.mxu0
    %v1025 = vadd.f32 %v912, %v1024
    %1026 = vmatmul.f32.gmra.mxu0 %v711
    %v1027 = vpop.f32.mrf.mxu0
    %v1028 = vadd.f32 %v915, %v1027
    %1029 = vmatmul.f32.gmra.mxu0 %v715
    %v1030 = vpop.f32.mrf.mxu0
    %v1031 = vadd.f32 %v918, %v1030
    %1032 = vmatmul.f32.gmra.mxu0 %v719
    %v1033 = vpop.f32.mrf.mxu0
    %v1034 = vadd.f32 %v921, %v1033
    %1035 = vmatmul.f32.gmra.mxu0 %v723
    %v1036 = vpop.f32.mrf.mxu0
    %v1037 = vadd.f32 %v924, %v1036
    %1038 = vmatmul.f32.gmra.mxu0 %v727
    %v1039 = vpop.f32.mrf.mxu0
    %v1040 = vadd.f32 %v927, %v1039
    %1041 = vmatmul.f32.gmra.mxu0 %v731
    %v1042 = vpop.f32.mrf.mxu0
    %v1043 = vadd.f32 %v930, %v1042
    %1044 = vmatmul.f32.gmra.mxu0 %v735
    %v1045 = vpop.f32.mrf.mxu0
    %v1046 = vadd.f32 %v933, %v1045
    %1047 = vmatmul.f32.gmra.mxu0 %v739
    %v1048 = vpop.f32.mrf.mxu0
    %v1049 = vadd.f32 %v936, %v1048
    %1050 = vmatmul.f32.gmra.mxu0 %v743
    %v1051 = vpop.f32.mrf.mxu0
    %v1052 = vadd.f32 %v939, %v1051
    %1053 = vmatmul.f32.gmra.mxu0 %v747
    %v1054 = vpop.f32.mrf.mxu0
    %v1055 = vadd.f32 %v942, %v1054
    %1056 = vmatmul.f32.gmra.mxu0 %v751
    %v1057 = vpop.f32.mrf.mxu0
    %v1058 = vadd.f32 %v945, %v1057
    %1059 = vmatmul.f32.gmra.mxu0 %v755
    %v1060 = vpop.f32.mrf.mxu0
    %v1061 = vadd.f32 %v948, %v1060
    %1062 = vmatmul.f32.gmra.mxu0 %v759
    %v1063 = vpop.f32.mrf.mxu0
    %v1064 = vadd.f32 %v951, %v1063
    %1065 = vmatmul.f32.gmra.mxu0 %v763
    %v1066 = vpop.f32.mrf.mxu0
    %v1067 = vadd.f32 %v954, %v1066
    %1068 = vmatmul.f32.gmra.mxu0 %v767
    %v1069 = vpop.f32.mrf.mxu0
    %v1070 = vadd.f32 %v957, %v1069
    %1071 = vmatmul.f32.gmra.mxu0 %v771
    %v1072 = vpop.f32.mrf.mxu0
    %v1073 = vadd.f32 %v960, %v1072
    %1074 = vmatmul.f32.gmra.mxu0 %v775
    %v1075 = vpop.f32.mrf.mxu0
    %v1076 = vadd.f32 %v963, %v1075
    %1077 = vmatmul.f32.gmra.mxu0 %v779
    %v1078 = vpop.f32.mrf.mxu0
    %v1079 = vadd.f32 %v966, %v1078
    %1080 = vmatmul.f32.gmra.mxu0 %v783
    %v1081 = vpop.f32.mrf.mxu0
    %v1082 = vadd.f32 %v969, %v1081
    %1083 = vmatmul.f32.gmra.mxu0 %v787
    %v1084 = vpop.f32.mrf.mxu0
    %v1085 = vadd.f32 %v972, %v1084
    %1086 = vmatmul.f32.gmra.mxu0 %v791
    %v1087 = vpop.f32.mrf.mxu0
    %v1088 = vadd.f32 %v975, %v1087
    %1089 = vmatmul.f32.gmra.mxu0 %v795
    %v1090 = vpop.f32.mrf.mxu0
    %v1091 = vadd.f32 %v978, %v1090
    %1092 = vmatmul.f32.gmra.mxu0 %v799
    %v1093 = vpop.f32.mrf.mxu0
    %v1094 = vadd.f32 %v981, %v1093
    %1095 = vdwg.mxu0
    %1096 = vmatpush.msra.mxu0 %v849
    %1097 = vmatpush.msra.mxu0 %v848
    %1098 = vmatpush.msra.mxu0 %v847
    %1099 = vmatpush.msra.mxu0 %v846
    %1100 = vmatpush.msra.mxu0 %v845
    %1101 = vmatpush.msra.mxu0 %v844
    %1102 = vmatpush.msra.mxu0 %v843
    %1103 = vmatpush.msra.mxu0 %v842
    %1104 = vmatpush.msra.mxu0 %v841
    %1105 = vmatpush.msra.mxu0 %v840
    %1106 = vmatpush.msra.mxu0 %v839
    %1107 = vmatpush.msra.mxu0 %v838
    %1108 = vmatpush.msra.mxu0 %v837
    %1109 = vmatpush.msra.mxu0 %v836
    %1110 = vmatpush.msra.mxu0 %v835
    %1111 = vmatpush.msra.mxu0 %v834
    %1112 = vmatmul.f32.gmra.mxu0 %v676
    %v1113 = vpop.f32.mrf.mxu0
    %v1114 = vadd.f32 %v1001, %v1113
    %1115 = vmatmul.f32.gmra.mxu0 %v680
    %v1116 = vpop.f32.mrf.mxu0
    %v1117 = vadd.f32 %v1004, %v1116
    %1118 = vmatmul.f32.gmra.mxu0 %v684
    %v1119 = vpop.f32.mrf.mxu0
    %v1120 = vadd.f32 %v1007, %v1119
    %1121 = vmatmul.f32.gmra.mxu0 %v688
    %v1122 = vpop.f32.mrf.mxu0
    %v1123 = vadd.f32 %v1010, %v1122
    %1124 = vmatmul.f32.gmra.mxu0 %v692
    %v1125 = vpop.f32.mrf.mxu0
    %v1126 = vadd.f32 %v1013, %v1125
    %1127 = vmatmul.f32.gmra.mxu0 %v696
    %v1128 = vpop.f32.mrf.mxu0
    %v1129 = vadd.f32 %v1016, %v1128
    %1130 = vmatmul.f32.gmra.mxu0 %v700
    %v1131 = vpop.f32.mrf.mxu0
    %v1132 = vadd.f32 %v1019, %v1131
    %1133 = vmatmul.f32.gmra.mxu0 %v704
    %v1134 = vpop.f32.mrf.mxu0
    %v1135 = vadd.f32 %v1022, %v1134
    %1136 = vmatmul.f32.gmra.mxu0 %v708
    %v1137 = vpop.f32.mrf.mxu0
    %v1138 = vadd.f32 %v1025, %v1137
    %1139 = vmatmul.f32.gmra.mxu0 %v712
    %v1140 = vpop.f32.mrf.mxu0
    %v1141 = vadd.f32 %v1028, %v1140
    %1142 = vmatmul.f32.gmra.mxu0 %v716
    %v1143 = vpop.f32.mrf.mxu0
    %v1144 = vadd.f32 %v1031, %v1143
    %1145 = vmatmul.f32.gmra.mxu0 %v720
    %v1146 = vpop.f32.mrf.mxu0
    %v1147 = vadd.f32 %v1034, %v1146
    %1148 = vmatmul.f32.gmra.mxu0 %v724
    %v1149 = vpop.f32.mrf.mxu0
    %v1150 = vadd.f32 %v1037, %v1149
    %1151 = vmatmul.f32.gmra.mxu0 %v728
    %v1152 = vpop.f32.mrf.mxu0
    %v1153 = vadd.f32 %v1040, %v1152
    %1154 = vmatmul.f32.gmra.mxu0 %v732
    %v1155 = vpop.f32.mrf.mxu0
    %v1156 = vadd.f32 %v1043, %v1155
    %1157 = vmatmul.f32.gmra.mxu0 %v736
    %v1158 = vpop.f32.mrf.mxu0
    %v1159 = vadd.f32 %v1046, %v1158
    %1160 = vmatmul.f32.gmra.mxu0 %v740
    %v1161 = vpop.f32.mrf.mxu0
    %v1162 = vadd.f32 %v1049, %v1161
    %1163 = vmatmul.f32.gmra.mxu0 %v744
    %v1164 = vpop.f32.mrf.mxu0
    %v1165 = vadd.f32 %v1052, %v1164
    %1166 = vmatmul.f32.gmra.mxu0 %v748
    %v1167 = vpop.f32.mrf.mxu0
    %v1168 = vadd.f32 %v1055, %v1167
    %1169 = vmatmul.f32.gmra.mxu0 %v752
    %v1170 = vpop.f32.mrf.mxu0
    %v1171 = vadd.f32 %v1058, %v1170
    %1172 = vmatmul.f32.gmra.mxu0 %v756
    %v1173 = vpop.f32.mrf.mxu0
    %v1174 = vadd.f32 %v1061, %v1173
    %1175 = vmatmul.f32.gmra.mxu0 %v760
    %v1176 = vpop.f32.mrf.mxu0
    %v1177 = vadd.f32 %v1064, %v1176
    %1178 = vmatmul.f32.gmra.mxu0 %v764
    %v1179 = vpop.f32.mrf.mxu0
    %v1180 = vadd.f32 %v1067, %v1179
    %1181 = vmatmul.f32.gmra.mxu0 %v768
    %v1182 = vpop.f32.mrf.mxu0
    %v1183 = vadd.f32 %v1070, %v1182
    %1184 = vmatmul.f32.gmra.mxu0 %v772
    %v1185 = vpop.f32.mrf.mxu0
    %v1186 = vadd.f32 %v1073, %v1185
    %1187 = vmatmul.f32.gmra.mxu0 %v776
    %v1188 = vpop.f32.mrf.mxu0
    %v1189 = vadd.f32 %v1076, %v1188
    %1190 = vmatmul.f32.gmra.mxu0 %v780
    %v1191 = vpop.f32.mrf.mxu0
    %v1192 = vadd.f32 %v1079, %v1191
    %1193 = vmatmul.f32.gmra.mxu0 %v784
    %v1194 = vpop.f32.mrf.mxu0
    %v1195 = vadd.f32 %v1082, %v1194
    %1196 = vmatmul.f32.gmra.mxu0 %v788
    %v1197 = vpop.f32.mrf.mxu0
    %v1198 = vadd.f32 %v1085, %v1197
    %1199 = vmatmul.f32.gmra.mxu0 %v792
    %v1200 = vpop.f32.mrf.mxu0
    %v1201 = vadd.f32 %v1088, %v1200
    %1202 = vmatmul.f32.gmra.mxu0 %v796
    %v1203 = vpop.f32.mrf.mxu0
    %v1204 = vadd.f32 %v1091, %v1203
    %1205 = vmatmul.f32.gmra.mxu0 %v800
    %v1206 = vpop.f32.mrf.mxu0
    %v1207 = vadd.f32 %v1094, %v1206
    %1208 = vdwg.mxu0
    %1209 = vmatpush.msra.mxu0 %v865
    %1210 = vmatpush.msra.mxu0 %v864
    %1211 = vmatpush.msra.mxu0 %v863
    %1212 = vmatpush.msra.mxu0 %v862
    %1213 = vmatpush.msra.mxu0 %v861
    %1214 = vmatpush.msra.mxu0 %v860
    %1215 = vmatpush.msra.mxu0 %v859
    %1216 = vmatpush.msra.mxu0 %v858
    %1217 = vmatpush.msra.mxu0 %v857
    %1218 = vmatpush.msra.mxu0 %v856
    %1219 = vmatpush.msra.mxu0 %v855
    %1220 = vmatpush.msra.mxu0 %v854
    %1221 = vmatpush.msra.mxu0 %v853
    %1222 = vmatpush.msra.mxu0 %v852
    %1223 = vmatpush.msra.mxu0 %v851
    %1224 = vmatpush.msra.mxu0 %v850
    %1225 = vmatmul.f32.gmra.mxu0 %v677
    %v1226 = vpop.f32.mrf.mxu0
    %v1227 = vadd.f32 %v1114, %v1226
    %1228 = vmatmul.f32.gmra.mxu0 %v681
    %v1229 = vpop.f32.mrf.mxu0
    %v1230 = vadd.f32 %v1117, %v1229
    %1231 = vmatmul.f32.gmra.mxu0 %v685
    %v1232 = vpop.f32.mrf.mxu0
    %v1233 = vadd.f32 %v1120, %v1232
    %1234 = vmatmul.f32.gmra.mxu0 %v689
    %v1235 = vpop.f32.mrf.mxu0
    %v1236 = vadd.f32 %v1123, %v1235
    %1237 = vmatmul.f32.gmra.mxu0 %v693
    %v1238 = vpop.f32.mrf.mxu0
    %v1239 = vadd.f32 %v1126, %v1238
    %1240 = vmatmul.f32.gmra.mxu0 %v697
    %v1241 = vpop.f32.mrf.mxu0
    %v1242 = vadd.f32 %v1129, %v1241
    %1243 = vmatmul.f32.gmra.mxu0 %v701
    %v1244 = vpop.f32.mrf.mxu0
    %v1245 = vadd.f32 %v1132, %v1244
    %1246 = vmatmul.f32.gmra.mxu0 %v705
    %v1247 = vpop.f32.mrf.mxu0
    %v1248 = vadd.f32 %v1135, %v1247
    %1249 = vmatmul.f32.gmra.mxu0 %v709
    %v1250 = vpop.f32.mrf.mxu0
    %v1251 = vadd.f32 %v1138, %v1250
    %1252 = vmatmul.f32.gmra.mxu0 %v713
    %v1253 = vpop.f32.mrf.mxu0
    %v1254 = vadd.f32 %v1141, %v1253
    %1255 = vmatmul.f32.gmra.mxu0 %v717
    %v1256 = vpop.f32.mrf.mxu0
    %v1257 = vadd.f32 %v1144, %v1256
    %1258 = vmatmul.f32.gmra.mxu0 %v721
    %v1259 = vpop.f32.mrf.mxu0
    %v1260 = vadd.f32 %v1147, %v1259
    %1261 = vmatmul.f32.gmra.mxu0 %v725
    %v1262 = vpop.f32.mrf.mxu0
    %v1263 = vadd.f32 %v1150, %v1262
    %1264 = vmatmul.f32.gmra.mxu0 %v729
    %v1265 = vpop.f32.mrf.mxu0
    %v1266 = vadd.f32 %v1153, %v1265
    %1267 = vmatmul.f32.gmra.mxu0 %v733
    %v1268 = vpop.f32.mrf.mxu0
    %v1269 = vadd.f32 %v1156, %v1268
    %1270 = vmatmul.f32.gmra.mxu0 %v737
    %v1271 = vpop.f32.mrf.mxu0
    %v1272 = vadd.f32 %v1159, %v1271
    %1273 = vmatmul.f32.gmra.mxu0 %v741
    %v1274 = vpop.f32.mrf.mxu0
    %v1275 = vadd.f32 %v1162, %v1274
    %1276 = vmatmul.f32.gmra.mxu0 %v745
    %v1277 = vpop.f32.mrf.mxu0
    %v1278 = vadd.f32 %v1165, %v1277
    %1279 = vmatmul.f32.gmra.mxu0 %v749
    %v1280 = vpop.f32.mrf.mxu0
    %v1281 = vadd.f32 %v1168, %v1280
    %1282 = vmatmul.f32.gmra.mxu0 %v753
    %v1283 = vpop.f32.mrf.mxu0
    %v1284 = vadd.f32 %v1171, %v1283
    %1285 = vmatmul.f32.gmra.mxu0 %v757
    %v1286 = vpop.f32.mrf.mxu0
    %v1287 = vadd.f32 %v1174, %v1286
    %1288 = vmatmul.f32.gmra.mxu0 %v761
    %v1289 = vpop.f32.mrf.mxu0
    %v1290 = vadd.f32 %v1177, %v1289
    %1291 = vmatmul.f32.gmra.mxu0 %v765
    %v1292 = vpop.f32.mrf.mxu0
    %v1293 = vadd.f32 %v1180, %v1292
    %1294 = vmatmul.f32.gmra.mxu0 %v769
    %v1295 = vpop.f32.mrf.mxu0
    %v1296 = vadd.f32 %v1183, %v1295
    %1297 = vmatmul.f32.gmra.mxu0 %v773
    %v1298 = vpop.f32.mrf.mxu0
    %v1299 = vadd.f32 %v1186, %v1298
    %1300 = vmatmul.f32.gmra.mxu0 %v777
    %v1301 = vpop.f32.mrf.mxu0
    %v1302 = vadd.f32 %v1189, %v1301
    %1303 = vmatmul.f32.gmra.mxu0 %v781
    %v1304 = vpop.f32.mrf.mxu0
    %v1305 = vadd.f32 %v1192, %v1304
    %1306 = vmatmul.f32.gmra.mxu0 %v785
    %v1307 = vpop.f32.mrf.mxu0
    %v1308 = vadd.f32 %v1195, %v1307
    %1309 = vmatmul.f32.gmra.mxu0 %v789
    %v1310 = vpop.f32.mrf.mxu0
    %v1311 = vadd.f32 %v1198, %v1310
    %1312 = vmatmul.f32.gmra.mxu0 %v793
    %v1313 = vpop.f32.mrf.mxu0
    %v1314 = vadd.f32 %v1201, %v1313
    %1315 = vmatmul.f32.gmra.mxu0 %v797
    %v1316 = vpop.f32.mrf.mxu0
    %v1317 = vadd.f32 %v1204, %v1316
    %1318 = vmatmul.f32.gmra.mxu0 %v801
    %v1319 = vpop.f32.mrf.mxu0
    %v1320 = vadd.f32 %v1207, %v1319
    %1321 = vdwg.mxu0
    %1322 = vst [vmem:[#allocation7] sm:$0xff] %v1227
    %1323 = vst [vmem:[#allocation7 + $0x8] sm:$0xff] %v1230
    %1324 = vst [vmem:[#allocation7 + $0x10] sm:$0xff] %v1233
    %1325 = vst [vmem:[#allocation7 + $0x18] sm:$0xff] %v1236
    %1326 = vst [vmem:[#allocation7 + $0x20] sm:$0xff] %v1239
    %1327 = vst [vmem:[#allocation7 + $0x28] sm:$0xff] %v1242
    %1328 = vst [vmem:[#allocation7 + $0x30] sm:$0xff] %v1245
    %1329 = vst [vmem:[#allocation7 + $0x38] sm:$0xff] %v1248
    %1330 = vst [vmem:[#allocation7 + $0x40] sm:$0xff] %v1251
    %1331 = vst [vmem:[#allocation7 + $0x48] sm:$0xff] %v1254
    %1332 = vst [vmem:[#allocation7 + $0x50] sm:$0xff] %v1257
    %1333 = vst [vmem:[#allocation7 + $0x58] sm:$0xff] %v1260
    %1334 = vst [vmem:[#allocation7 + $0x60] sm:$0xff] %v1263
    %1335 = vst [vmem:[#allocation7 + $0x68] sm:$0xff] %v1266
    %1336 = vst [vmem:[#allocation7 + $0x70] sm:$0xff] %v1269
    %1337 = vst [vmem:[#allocation7 + $0x78] sm:$0xff] %v1272
    %1338 = vst [vmem:[#allocation7 + $0x80] sm:$0xff] %v1275
    %1339 = vst [vmem:[#allocation7 + $0x88] sm:$0xff] %v1278
    %1340 = vst [vmem:[#allocation7 + $0x90] sm:$0xff] %v1281
    %1341 = vst [vmem:[#allocation7 + $0x98] sm:$0xff] %v1284
    %1342 = vst [vmem:[#allocation7 + $0xa0] sm:$0xff] %v1287
    %1343 = vst [vmem:[#allocation7 + $0xa8] sm:$0xff] %v1290
    %1344 = vst [vmem:[#allocation7 + $0xb0] sm:$0xff] %v1293
    %1345 = vst [vmem:[#allocation7 + $0xb8] sm:$0xff] %v1296
    %1346 = vst [vmem:[#allocation7 + $0xc0] sm:$0xff] %v1299
    %1347 = vst [vmem:[#allocation7 + $0xc8] sm:$0xff] %v1302
    %1348 = vst [vmem:[#allocation7 + $0xd0] sm:$0xff] %v1305
    %1349 = vst [vmem:[#allocation7 + $0xd8] sm:$0xff] %v1308
    %1350 = vst [vmem:[#allocation7 + $0xe0] sm:$0xff] %v1311
    %1351 = vst [vmem:[#allocation7 + $0xe8] sm:$0xff] %v1314
    %1352 = vst [vmem:[#allocation7 + $0xf0] sm:$0xff] %v1317
    %1353 = vst [vmem:[#allocation7 + $0xf8] sm:$0x3] %v1320
    // Predicated region
    $region30: #{tpu_custom_call.1} parent=1 // pred_check
      _
    $region31: #{tpu_custom_call.1} parent=1 // pred_check_branch
      %1355 = sbr.rel (0) target = $region33
    $region32: #{tpu_custom_call.1} parent=1 // pred_region
      %1357 = vsyncadd [#allocation4], 0
      %s1358 = sshll.u32 [#allocation7], 4
      %s1359 = int_to_ptr.vmem [resolvable:$true] %s1358
      %s1360 = sshll.u32 %s5, 4
      %s1361 = int_to_ptr.hbm [resolvable:$true] %s1360
      %1366 = dma.vmem_to_hbm [thread:$0]  %s1359, 4096, %s1361, [#allocation4], 128, 128, 8
    $region33: #{tpu_custom_call.1} parent=1 // pred_fallthru
      _
    // Predicated region
    $region34: #{tpu_custom_call.1} parent=1 // pred_check
      _
    $region35: #{tpu_custom_call.1} parent=1 // pred_check_branch
      %1368 = sbr.rel (0) target = $region37
    $region36: #{tpu_custom_call.1} parent=1 // pred_region
      %1370 = dma.done [#allocation4], 4096
    $region37: #{tpu_custom_call.1} parent=1 // pred_fallthru
      _
    %1371 = vsyncpa [#allocation3], 1
    %1372 = vsyncpa [#allocation6], 1
    %1373 = vsyncpa [#allocation4], 1

</llo_original>
